<compile_context>
chip_gen: v7x
topology: tpu7x:2x2x1
jax: 0.10.0
libtpu: 0.0.40
codegen_flags: <defaults>
</compile_context>

<pallas_src>
import functools

import numpy as np
import jax
import jax.numpy as jnp
from jax import lax
from jax.experimental import pallas as pl
from jax.experimental.pallas import tpu as pltpu

BN_EPS = 1e-5


@functools.lru_cache(maxsize=None)
def _gather_matrix(h, w, ho, wo):
    """Constant (9*S, H*W) 0/1 matrix for conv3x3 / stride 2 / pad 1.

    Row k*S + s selects the input pixel feeding tap k of output position s;
    an all-zero row is exactly the zero-padding contribution.
    """
    s, hw = ho * wo, h * w
    q = np.zeros((9 * s, hw), np.float32)
    for k in range(9):
        dh, dw = k // 3 - 1, k % 3 - 1
        for oh in range(ho):
            ih = 2 * oh + dh
            if not (0 <= ih < h):
                continue
            for ow in range(wo):
                iw = 2 * ow + dw
                if 0 <= iw < w:
                    q[k * s + oh * wo + ow, ih * w + iw] = 1.0
    return q


def aux_head_kernel(x_ref, qall_ref, wconv_ref, w1_ref, w2_ref, pvec_ref,
                    tgt_ref, out_ref, *, batch, cin, s, cout, hidden,
                    class_num):
    # ---- conv3x3 stride-2 pad-1: one gather matmul + one K=9*Cin matmul ----
    x_t = jnp.transpose(x_ref[...])                         # (H*W, B*Cin)
    pall = jnp.dot(qall_ref[...], x_t,
                   preferred_element_type=jnp.float32)      # (9*S, B*Cin)

    # Rearrange (tap, batch) blocks into (B*S, 9*Cin) patches so that the
    # 9-tap sum is folded into the MXU contraction.
    patches = jnp.concatenate(
        [jnp.concatenate(
            [pall[k * s:(k + 1) * s, b * cin:(b + 1) * cin]
             for k in range(9)], axis=1)                    # (S, 9*Cin)
         for b in range(batch)], axis=0)                    # (B*S, 9*Cin)

    y = jnp.dot(patches, wconv_ref[...],
                preferred_element_type=jnp.float32)         # (B*S, Cout)

    # ---- BatchNorm2d (training-mode biased batch stats, two-pass) + ReLU ----
    n = batch * s
    mu = jnp.sum(y, axis=0, keepdims=True) * (1.0 / n)      # (1, Cout)
    d = y - mu
    var = jnp.sum(d * d, axis=0, keepdims=True) * (1.0 / n)
    gamma = pvec_ref[0:1, 0:cout]
    beta = pvec_ref[1:2, 0:cout]
    scale = gamma * lax.rsqrt(var + BN_EPS)
    y = jnp.maximum(d * scale + beta, 0.0)                  # BN + ReLU

    # ---- AdaptiveAvgPool2d((1,1)) + Flatten ----
    pooled = jnp.mean(y.reshape(batch, s, cout), axis=1)    # (B, Cout)

    # ---- Linear(Cout, hidden) + ReLU -> Linear(hidden, class_num) ----
    b1 = pvec_ref[2:3, :]                                   # (1, hidden)
    b2 = pvec_ref[3:4, :]                                   # (1, hidden), 0-padded
    hdn = jnp.maximum(
        jnp.dot(pooled, w1_ref[...], preferred_element_type=jnp.float32) + b1,
        0.0)
    logits = jnp.dot(hdn, w2_ref[...],
                     preferred_element_type=jnp.float32) + b2   # (B, hidden)

    # ---- CrossEntropyLoss (mean); padded lanes (>= class_num) masked out ----
    lane = lax.broadcasted_iota(jnp.int32, (batch, hidden), 1)
    valid = lane < class_num
    m = jnp.max(jnp.where(valid, logits, -1e30), axis=-1, keepdims=True)
    e = jnp.where(valid, jnp.exp(logits - m), 0.0)
    lse = m + jnp.log(jnp.sum(e, axis=-1, keepdims=True))
    onehot = jnp.where(lane == tgt_ref[...], 1.0, 0.0)      # single compare
    picked = jnp.sum(logits * onehot, axis=-1, keepdims=True)
    loss = jnp.sum(lse - picked, axis=0, keepdims=True) * (1.0 / batch)  # (1,1)

    # ---- one lane-dense output block: rows [0,B) logits, row B loss ----
    out_ref[0:batch, :] = logits
    out_ref[batch:batch + 1, :] = jnp.broadcast_to(loss, (1, hidden))


def aux_network_forward(x_nchw, params, target, class_num=10):
    """Pallas-backed forward of AuxNetwork('InfoPro'). Returns (loss, logits)."""
    B, Cin, H, W = x_nchw.shape
    Ho = (H + 2 - 3) // 2 + 1
    Wo = (W + 2 - 3) // 2 + 1
    S = Ho * Wo
    Cout = params["wconv"].shape[-1]
    hidden = params["w1"].shape[-1]
    assert Cout <= hidden and class_num <= hidden

    # Activation-side glue is metadata-only (contiguous reshape, no HBM copy).
    x2 = x_nchw.reshape(B * Cin, H * W).astype(jnp.float32)
    wconv_flat = params["wconv"].reshape(9 * Cin, Cout)     # rows = (kh, kw, ci)
    qall = jnp.asarray(_gather_matrix(H, W, Ho, Wo))        # constant (9*S, H*W)

    # Tiny per-channel params packed into one lane-dense block; w2/b2 are
    # zero-padded to the hidden width so the logits output block is lane-dense.
    pvec = jnp.zeros((4, hidden), jnp.float32)
    pvec = pvec.at[0, :Cout].set(params["gamma"])
    pvec = pvec.at[1, :Cout].set(params["beta"])
    pvec = pvec.at[2, :].set(params["b1"])
    pvec = pvec.at[3, :class_num].set(params["b2"])
    w2_pad = jnp.zeros((hidden, hidden), jnp.float32).at[:, :class_num].set(
        params["w2"])
    tgt_col = target.astype(jnp.int32).reshape(B, 1)

    kernel = functools.partial(
        aux_head_kernel, batch=B, cin=Cin, s=S, cout=Cout, hidden=hidden,
        class_num=class_num)

    vmem = pl.BlockSpec(memory_space=pltpu.MemorySpace.VMEM)
    out = pl.pallas_call(
        kernel,
        out_shape=jax.ShapeDtypeStruct((B + 1, hidden), jnp.float32),
        in_specs=[vmem] * 7,
        out_specs=vmem,
    )(x2, qall, wconv_flat, params["w1"], w2_pad, pvec, tgt_col)

    loss = out[B, 0]
    logits = out[:B, :class_num]
    return loss, logits


def reference_forward(x_nchw, params, target, class_num=10):
    """Pure-JAX reference for correctness checking."""
    x = jnp.transpose(x_nchw, (0, 2, 3, 1)).astype(jnp.float32)
    y = lax.conv_general_dilated(
        x, params["wconv"], window_strides=(2, 2), padding=[(1, 1), (1, 1)],
        dimension_numbers=("NHWC", "HWIO", "NHWC"))
    mu = jnp.mean(y, axis=(0, 1, 2), keepdims=True)
    var = jnp.mean((y - mu) ** 2, axis=(0, 1, 2), keepdims=True)
    y = (y - mu) * lax.rsqrt(var + BN_EPS)
    y = y * params["gamma"] + params["beta"]
    y = jnp.maximum(y, 0.0)
    pooled = jnp.mean(y, axis=(1, 2))
    h = jnp.maximum(pooled @ params["w1"] + params["b1"], 0.0)
    logits = h @ params["w2"] + params["b2"]
    logp = jax.nn.log_softmax(logits, axis=-1)
    loss = -jnp.mean(logp[jnp.arange(x.shape[0]), target])
    return loss, logits


def init_params(key, cin=16, widen=1, class_num=10):
    cout = int(32 * widen)
    hidden = int(128 * widen)
    k = jax.random.split(key, 7)
    return {
        "wconv": (jax.random.normal(k[0], (3, 3, cin, cout), jnp.float32)
                  * (2.0 / (9 * cin)) ** 0.5),
        "gamma": 1.0 + 0.1 * jax.random.normal(k[1], (cout,), jnp.float32),
        "beta": 0.1 * jax.random.normal(k[2], (cout,), jnp.float32),
        "w1": jax.random.normal(k[3], (cout, hidden), jnp.float32) * cout ** -0.5,
        "b1": jax.random.normal(k[4], (hidden,), jnp.float32) * 0.01,
        "w2": jax.random.normal(k[5], (hidden, class_num), jnp.float32) * hidden ** -0.5,
        "b2": jax.random.normal(k[6], (class_num,), jnp.float32) * 0.01,
    }


if __name__ == "__main__":
    key = jax.random.PRNGKey(0)
    kx, kp, kt = jax.random.split(key, 3)

    B, Cin, H, W = 2, 16, 16, 16       # inplanes=16 (NCHW input, like PyTorch)
    class_num = 10
    x = jax.random.normal(kx, (B, Cin, H, W), jnp.float32)
    target = jax.random.randint(kt, (B,), 0, class_num)
    params = init_params(kp, cin=Cin, class_num=class_num)

    loss, logits = jax.jit(
        functools.partial(aux_network_forward, class_num=class_num)
    )(x, params, target)
    jax.block_until_ready((loss, logits))

    ref_loss, ref_logits = reference_forward(x, params, target, class_num)
    assert jnp.allclose(logits, ref_logits, atol=1e-4, rtol=1e-4), "logits mismatch"
    assert jnp.allclose(loss, ref_loss, atol=1e-4, rtol=1e-4), "loss mismatch"

    print("KERNEL_OK")
</pallas_src>

<mosaic_0001>
module attributes {stable_mosaic.version = 11 : i64} {
  func.func @aux_head_kernel(%arg0: memref<32x256xf32, #tpu.memory_space<vmem>>, %arg1: memref<576x256xf32, #tpu.memory_space<vmem>>, %arg2: memref<144x32xf32, #tpu.memory_space<vmem>>, %arg3: memref<32x128xf32, #tpu.memory_space<vmem>>, %arg4: memref<128x128xf32, #tpu.memory_space<vmem>>, %arg5: memref<4x128xf32, #tpu.memory_space<vmem>>, %arg6: memref<2x1xi32, #tpu.memory_space<vmem>>, %arg7: memref<3x128xf32, #tpu.memory_space<vmem>>) attributes {dimension_semantics = [], scalar_prefetch = 0 : i64, scratch_operands = 0 : i64, tpu.core_type = #tpu.core_type<tc>} {
    %c0 = arith.constant 0 : index
    %c0_0 = arith.constant 0 : index
    %0 = vector.load %arg0[%c0, %c0_0] : memref<32x256xf32, #tpu.memory_space<vmem>>, vector<32x256xf32>
    %1 = tpu.transpose %0, [1, 0] : vector<32x256xf32> -> vector<256x32xf32>
    %c0_1 = arith.constant 0 : index
    %c0_2 = arith.constant 0 : index
    %2 = vector.load %arg1[%c0_1, %c0_2] : memref<576x256xf32, #tpu.memory_space<vmem>>, vector<576x256xf32>
    %cst = arith.constant dense<0.000000e+00> : vector<576x32xf32>
    %3 = tpu.matmul %2, %1, %cst {dimension_numbers = #tpu.dot_dimension_numbers<[1], [0], [0], [1], [0, 0, 1, 1], [], []>} : vector<576x256xf32>, vector<256x32xf32>, vector<576x32xf32> -> vector<576x32xf32>
    %4 = vector.extract_strided_slice %3 {offsets = [0, 0], sizes = [64, 16], strides = [1, 1]} : vector<576x32xf32> to vector<64x16xf32>
    %5 = vector.extract_strided_slice %3 {offsets = [64, 0], sizes = [64, 16], strides = [1, 1]} : vector<576x32xf32> to vector<64x16xf32>
    %6 = vector.extract_strided_slice %3 {offsets = [128, 0], sizes = [64, 16], strides = [1, 1]} : vector<576x32xf32> to vector<64x16xf32>
    %7 = vector.extract_strided_slice %3 {offsets = [192, 0], sizes = [64, 16], strides = [1, 1]} : vector<576x32xf32> to vector<64x16xf32>
    %8 = vector.extract_strided_slice %3 {offsets = [256, 0], sizes = [64, 16], strides = [1, 1]} : vector<576x32xf32> to vector<64x16xf32>
    %9 = vector.extract_strided_slice %3 {offsets = [320, 0], sizes = [64, 16], strides = [1, 1]} : vector<576x32xf32> to vector<64x16xf32>
    %10 = vector.extract_strided_slice %3 {offsets = [384, 0], sizes = [64, 16], strides = [1, 1]} : vector<576x32xf32> to vector<64x16xf32>
    %11 = vector.extract_strided_slice %3 {offsets = [448, 0], sizes = [64, 16], strides = [1, 1]} : vector<576x32xf32> to vector<64x16xf32>
    %12 = vector.extract_strided_slice %3 {offsets = [512, 0], sizes = [64, 16], strides = [1, 1]} : vector<576x32xf32> to vector<64x16xf32>
    %13 = tpu.concatenate %4, %5, %6, %7, %8, %9, %10, %11, %12 in 1 : vector<64x16xf32>, vector<64x16xf32>, vector<64x16xf32>, vector<64x16xf32>, vector<64x16xf32>, vector<64x16xf32>, vector<64x16xf32>, vector<64x16xf32>, vector<64x16xf32> -> vector<64x144xf32>
    %14 = vector.extract_strided_slice %3 {offsets = [0, 16], sizes = [64, 16], strides = [1, 1]} : vector<576x32xf32> to vector<64x16xf32>
    %15 = vector.extract_strided_slice %3 {offsets = [64, 16], sizes = [64, 16], strides = [1, 1]} : vector<576x32xf32> to vector<64x16xf32>
    %16 = vector.extract_strided_slice %3 {offsets = [128, 16], sizes = [64, 16], strides = [1, 1]} : vector<576x32xf32> to vector<64x16xf32>
    %17 = vector.extract_strided_slice %3 {offsets = [192, 16], sizes = [64, 16], strides = [1, 1]} : vector<576x32xf32> to vector<64x16xf32>
    %18 = vector.extract_strided_slice %3 {offsets = [256, 16], sizes = [64, 16], strides = [1, 1]} : vector<576x32xf32> to vector<64x16xf32>
    %19 = vector.extract_strided_slice %3 {offsets = [320, 16], sizes = [64, 16], strides = [1, 1]} : vector<576x32xf32> to vector<64x16xf32>
    %20 = vector.extract_strided_slice %3 {offsets = [384, 16], sizes = [64, 16], strides = [1, 1]} : vector<576x32xf32> to vector<64x16xf32>
    %21 = vector.extract_strided_slice %3 {offsets = [448, 16], sizes = [64, 16], strides = [1, 1]} : vector<576x32xf32> to vector<64x16xf32>
    %22 = vector.extract_strided_slice %3 {offsets = [512, 16], sizes = [64, 16], strides = [1, 1]} : vector<576x32xf32> to vector<64x16xf32>
    %23 = tpu.concatenate %14, %15, %16, %17, %18, %19, %20, %21, %22 in 1 : vector<64x16xf32>, vector<64x16xf32>, vector<64x16xf32>, vector<64x16xf32>, vector<64x16xf32>, vector<64x16xf32>, vector<64x16xf32>, vector<64x16xf32>, vector<64x16xf32> -> vector<64x144xf32>
    %24 = tpu.concatenate %13, %23 in 0 : vector<64x144xf32>, vector<64x144xf32> -> vector<128x144xf32>
    %c0_3 = arith.constant 0 : index
    %c0_4 = arith.constant 0 : index
    %25 = vector.load %arg2[%c0_3, %c0_4] : memref<144x32xf32, #tpu.memory_space<vmem>>, vector<144x32xf32>
    %cst_5 = arith.constant dense<0.000000e+00> : vector<128x32xf32>
    %26 = tpu.matmul %24, %25, %cst_5 {dimension_numbers = #tpu.dot_dimension_numbers<[1], [0], [0], [1], [0, 0, 1, 1], [], []>} : vector<128x144xf32>, vector<144x32xf32>, vector<128x32xf32> -> vector<128x32xf32>
    %cst_6 = arith.constant dense<0.000000e+00> : vector<32xf32>
    %27 = vector.multi_reduction <add>, %26, %cst_6 [0] : vector<128x32xf32> to vector<32xf32>
    %28 = vector.shape_cast %27 : vector<32xf32> to vector<1x32xf32>
    %cst_7 = arith.constant 7.812500e-03 : f32
    %29 = vector.broadcast %cst_7 : f32 to vector<1x32xf32>
    %30 = arith.mulf %28, %29 : vector<1x32xf32>
    %31 = vector.broadcast %30 : vector<1x32xf32> to vector<128x32xf32>
    %32 = arith.subf %26, %31 : vector<128x32xf32>
    %33 = arith.mulf %32, %32 : vector<128x32xf32>
    %cst_8 = arith.constant dense<0.000000e+00> : vector<32xf32>
    %34 = vector.multi_reduction <add>, %33, %cst_8 [0] : vector<128x32xf32> to vector<32xf32>
    %35 = vector.shape_cast %34 : vector<32xf32> to vector<1x32xf32>
    %cst_9 = arith.constant 7.812500e-03 : f32
    %36 = vector.broadcast %cst_9 : f32 to vector<1x32xf32>
    %37 = arith.mulf %35, %36 : vector<1x32xf32>
    %c0_10 = arith.constant 0 : index
    %c0_11 = arith.constant 0 : index
    %38 = vector.load %arg5[%c0_10, %c0_11] : memref<4x128xf32, #tpu.memory_space<vmem>>, vector<1x32xf32>
    %c1 = arith.constant 1 : index
    %c0_12 = arith.constant 0 : index
    %39 = vector.load %arg5[%c1, %c0_12] : memref<4x128xf32, #tpu.memory_space<vmem>>, vector<1x32xf32>
    %cst_13 = arith.constant 9.99999974E-6 : f32
    %40 = vector.broadcast %cst_13 : f32 to vector<1x32xf32>
    %41 = arith.addf %37, %40 : vector<1x32xf32>
    %42 = math.rsqrt %41 : vector<1x32xf32>
    %43 = arith.mulf %38, %42 : vector<1x32xf32>
    %44 = vector.broadcast %43 : vector<1x32xf32> to vector<128x32xf32>
    %45 = arith.mulf %32, %44 : vector<128x32xf32>
    %46 = vector.broadcast %39 : vector<1x32xf32> to vector<128x32xf32>
    %47 = arith.addf %45, %46 : vector<128x32xf32>
    %cst_14 = arith.constant 0.000000e+00 : f32
    %48 = vector.broadcast %cst_14 : f32 to vector<128x32xf32>
    %49 = arith.maximumf %47, %48 : vector<128x32xf32>
    %50 = vector.shape_cast %49 : vector<128x32xf32> to vector<2x64x32xf32>
    %cst_15 = arith.constant dense<0.000000e+00> : vector<2x32xf32>
    %51 = vector.multi_reduction <add>, %50, %cst_15 [1] : vector<2x64x32xf32> to vector<2x32xf32>
    %cst_16 = arith.constant 6.400000e+01 : f32
    %52 = vector.broadcast %cst_16 : f32 to vector<2x32xf32>
    %53 = arith.divf %51, %52 : vector<2x32xf32>
    %c2 = arith.constant 2 : index
    %c0_17 = arith.constant 0 : index
    %54 = vector.load %arg5[%c2, %c0_17] : memref<4x128xf32, #tpu.memory_space<vmem>>, vector<1x128xf32>
    %c3 = arith.constant 3 : index
    %c0_18 = arith.constant 0 : index
    %55 = vector.load %arg5[%c3, %c0_18] : memref<4x128xf32, #tpu.memory_space<vmem>>, vector<1x128xf32>
    %c0_19 = arith.constant 0 : index
    %c0_20 = arith.constant 0 : index
    %56 = vector.load %arg3[%c0_19, %c0_20] : memref<32x128xf32, #tpu.memory_space<vmem>>, vector<32x128xf32>
    %cst_21 = arith.constant dense<0.000000e+00> : vector<2x128xf32>
    %57 = tpu.matmul %53, %56, %cst_21 {dimension_numbers = #tpu.dot_dimension_numbers<[1], [0], [0], [1], [0, 0, 1, 1], [], []>} : vector<2x32xf32>, vector<32x128xf32>, vector<2x128xf32> -> vector<2x128xf32>
    %58 = vector.broadcast %54 : vector<1x128xf32> to vector<2x128xf32>
    %59 = arith.addf %57, %58 : vector<2x128xf32>
    %cst_22 = arith.constant 0.000000e+00 : f32
    %60 = vector.broadcast %cst_22 : f32 to vector<2x128xf32>
    %61 = arith.maximumf %59, %60 : vector<2x128xf32>
    %c0_23 = arith.constant 0 : index
    %c0_24 = arith.constant 0 : index
    %62 = vector.load %arg4[%c0_23, %c0_24] : memref<128x128xf32, #tpu.memory_space<vmem>>, vector<128x128xf32>
    %cst_25 = arith.constant dense<0.000000e+00> : vector<2x128xf32>
    %63 = tpu.matmul %61, %62, %cst_25 {dimension_numbers = #tpu.dot_dimension_numbers<[1], [0], [0], [1], [0, 0, 1, 1], [], []>} : vector<2x128xf32>, vector<128x128xf32>, vector<2x128xf32> -> vector<2x128xf32>
    %64 = vector.broadcast %55 : vector<1x128xf32> to vector<2x128xf32>
    %65 = arith.addf %63, %64 : vector<2x128xf32>
    %66 = tpu.iota {dimensions = array<i32: 1>} : vector<2x128xi32>
    %c10_i32 = arith.constant 10 : i32
    %67 = vector.broadcast %c10_i32 : i32 to vector<2x128xi32>
    %68 = arith.cmpi slt, %66, %67 : vector<2x128xi32>
    %cst_26 = arith.constant -1.000000e+30 : f32
    %69 = vector.broadcast %cst_26 : f32 to vector<2x128xf32>
    %70 = arith.select %68, %65, %69 : vector<2x128xi1>, vector<2x128xf32>
    %cst_27 = arith.constant dense<0xFF800000> : vector<2xf32>
    %71 = vector.multi_reduction <maximumf>, %70, %cst_27 [1] : vector<2x128xf32> to vector<2xf32>
    %72 = vector.shape_cast %71 : vector<2xf32> to vector<2x1xf32>
    %73 = vector.broadcast %72 : vector<2x1xf32> to vector<2x128xf32>
    %74 = arith.subf %65, %73 : vector<2x128xf32>
    %75 = math.exp %74 : vector<2x128xf32>
    %cst_28 = arith.constant 0.000000e+00 : f32
    %76 = vector.broadcast %cst_28 : f32 to vector<2x128xf32>
    %77 = arith.select %68, %75, %76 : vector<2x128xi1>, vector<2x128xf32>
    %cst_29 = arith.constant dense<0.000000e+00> : vector<2xf32>
    %78 = vector.multi_reduction <add>, %77, %cst_29 [1] : vector<2x128xf32> to vector<2xf32>
    %79 = vector.shape_cast %78 : vector<2xf32> to vector<2x1xf32>
    %80 = math.log %79 : vector<2x1xf32>
    %81 = arith.addf %72, %80 : vector<2x1xf32>
    %c0_30 = arith.constant 0 : index
    %c0_31 = arith.constant 0 : index
    %82 = vector.load %arg6[%c0_30, %c0_31] : memref<2x1xi32, #tpu.memory_space<vmem>>, vector<2x1xi32>
    %83 = vector.broadcast %82 : vector<2x1xi32> to vector<2x128xi32>
    %84 = arith.cmpi eq, %66, %83 : vector<2x128xi32>
    %cst_32 = arith.constant 1.000000e+00 : f32
    %cst_33 = arith.constant 0.000000e+00 : f32
    %85 = vector.broadcast %cst_32 : f32 to vector<2x128xf32>
    %86 = vector.broadcast %cst_33 : f32 to vector<2x128xf32>
    %87 = arith.select %84, %85, %86 : vector<2x128xi1>, vector<2x128xf32>
    %88 = arith.mulf %65, %87 : vector<2x128xf32>
    %cst_34 = arith.constant dense<0.000000e+00> : vector<2xf32>
    %89 = vector.multi_reduction <add>, %88, %cst_34 [1] : vector<2x128xf32> to vector<2xf32>
    %90 = vector.shape_cast %89 : vector<2xf32> to vector<2x1xf32>
    %91 = arith.subf %81, %90 : vector<2x1xf32>
    %cst_35 = arith.constant dense<0.000000e+00> : vector<1xf32>
    %92 = vector.multi_reduction <add>, %91, %cst_35 [0] : vector<2x1xf32> to vector<1xf32>
    %93 = vector.shape_cast %92 : vector<1xf32> to vector<1x1xf32>
    %cst_36 = arith.constant 5.000000e-01 : f32
    %94 = vector.broadcast %cst_36 : f32 to vector<1x1xf32>
    %95 = arith.mulf %93, %94 : vector<1x1xf32>
    %c0_37 = arith.constant 0 : index
    %c0_38 = arith.constant 0 : index
    %96 = vector.load %arg7[%c0_37, %c0_38] : memref<3x128xf32, #tpu.memory_space<vmem>>, vector<2x128xf32>
    tpu.vector_store %arg7[%c0_37, %c0_38], %65 {strides = array<i32>} : memref<3x128xf32, #tpu.memory_space<vmem>>, vector<2x128xf32>,
    %97 = vector.shape_cast %95 : vector<1x1xf32> to vector<1x1xf32>
    %98 = vector.broadcast %97 : vector<1x1xf32> to vector<1x128xf32>
    %c2_39 = arith.constant 2 : index
    %c0_40 = arith.constant 0 : index
    %99 = vector.load %arg7[%c2_39, %c0_40] : memref<3x128xf32, #tpu.memory_space<vmem>>, vector<1x128xf32>
    tpu.vector_store %arg7[%c2_39, %c0_40], %98 {strides = array<i32>} : memref<3x128xf32, #tpu.memory_space<vmem>>, vector<1x128xf32>,
    return
  }
}

</mosaic_0001>

<llo_original>
// kernel: aux_network_forward.1
$region0: #{aux_network_forward.1}
  #allocation0 [shape = 'u32[]', space=smem, size = 0x4, offset = 0x4, fixed_abs, tag = 'smem constant byte address 0x4 - core index']
  #allocation1 [shape = 'u32[144,128]{1,0:T(1,128)}', space=vmem, size = 0x12000, scoped, tag = 'internal scratch']
  %s0 = inlined_call_operand.vmem [shape: f32[32,256], index: 0, kind: input, shape index: {}]
  %s1 = inlined_call_operand.vmem [shape: f32[576,256], index: 1, kind: input, shape index: {}]
  %s2 = inlined_call_operand.vmem [shape: f32[144,32], index: 2, kind: input, shape index: {}]
  %s3 = inlined_call_operand.hbm [shape: f32[32,128], index: 3, kind: input, shape index: {}]
  %s4 = inlined_call_operand.vmem [shape: f32[128,128], index: 4, kind: input, shape index: {}]
  %s5 = inlined_call_operand.vmem [shape: f32[4,128], index: 5, kind: input, shape index: {}]
  %s6 = inlined_call_operand.vmem [shape: s32[2,1], index: 6, kind: input, shape index: {}]
  %s7 = inlined_call_operand.vmem [shape: f32[3,128], index: 7, kind: output, shape index: {}]
  %s8 = sld [smem:[#allocation0]]
  $region42: #{aux_network_forward.1} parent=0
    _
  %s10 = ssub.s32 1, %s8
  %s11 = scalar_select 0, %s10, %s8
  $region1: #{aux_network_forward.1} parent=0
    #allocation2 [shape = 'u8[16384]{0}', space=vmem, size = 0x4000, scoped, tag = 'input window, operand 3, single buffered']
    #allocation3 [shape = 's32[1]{0}', space=sflag, size = 0x4, scoped, tag = 'scoped memory for aux_network_forward.1']
    %12 = vsyncpa [#allocation3], 0
    // Predicated region
    $region2: #{aux_network_forward.1} parent=1 // pred_check
      _
    $region3: #{aux_network_forward.1} parent=1 // pred_check_branch
      %14 = sbr.rel (0) target = $region5
    $region4: #{aux_network_forward.1} parent=1 // pred_region
      _
    $region5: #{aux_network_forward.1} parent=1 // pred_fallthru
      _
    // Predicated region
    $region6: #{aux_network_forward.1} parent=1 // pred_check
      _
    $region7: #{aux_network_forward.1} parent=1 // pred_check_branch
      %16 = sbr.rel (0) target = $region9
    $region8: #{aux_network_forward.1} parent=1 // pred_region
      _
    $region9: #{aux_network_forward.1} parent=1 // pred_fallthru
      _
    // Predicated region
    $region10: #{aux_network_forward.1} parent=1 // pred_check
      _
    $region11: #{aux_network_forward.1} parent=1 // pred_check_branch
      %18 = sbr.rel (0) target = $region13
    $region12: #{aux_network_forward.1} parent=1 // pred_region
      _
    $region13: #{aux_network_forward.1} parent=1 // pred_fallthru
      _
    // Predicated region
    $region14: #{aux_network_forward.1} parent=1 // pred_check
      _
    $region15: #{aux_network_forward.1} parent=1 // pred_check_branch
      %20 = sbr.rel (0) target = $region17
    $region16: #{aux_network_forward.1} parent=1 // pred_region
      %s22 = ssub.s32 512, 512
      %23 = vsyncadd [#allocation3], %s22
      %s24 = sshll.u32 [#allocation2], 4
      %s25 = int_to_ptr.vmem [resolvable:$true] %s24
      %30 = dma.hbm_to_vmem [thread:$0]  %s3, 512, %s25, [#allocation3], 128, 128, 8
    $region17: #{aux_network_forward.1} parent=1 // pred_fallthru
      _
    // Predicated region
    $region18: #{aux_network_forward.1} parent=1 // pred_check
      _
    $region19: #{aux_network_forward.1} parent=1 // pred_check_branch
      %32 = sbr.rel (0) target = $region21
    $region20: #{aux_network_forward.1} parent=1 // pred_region
      _
    $region21: #{aux_network_forward.1} parent=1 // pred_fallthru
      _
    // Predicated region
    $region22: #{aux_network_forward.1} parent=1 // pred_check
      _
    $region23: #{aux_network_forward.1} parent=1 // pred_check_branch
      %34 = sbr.rel (0) target = $region25
    $region24: #{aux_network_forward.1} parent=1 // pred_region
      _
    $region25: #{aux_network_forward.1} parent=1 // pred_fallthru
      _
    // Predicated region
    $region26: #{aux_network_forward.1} parent=1 // pred_check
      _
    $region27: #{aux_network_forward.1} parent=1 // pred_check_branch
      %36 = sbr.rel (0) target = $region29
    $region28: #{aux_network_forward.1} parent=1 // pred_region
      _
    $region29: #{aux_network_forward.1} parent=1 // pred_fallthru
      _
    // Predicated region
    $region30: #{aux_network_forward.1} parent=1 // pred_check
      _
    $region31: #{aux_network_forward.1} parent=1 // pred_check_branch
      %38 = sbr.rel (0) target = $region33
    $region32: #{aux_network_forward.1} parent=1 // pred_region
      %39 = dma.done [#allocation3], 512
    $region33: #{aux_network_forward.1} parent=1 // pred_fallthru
      _
    %v40 = vld [vmem:[%s0] sm:$0xff]
    %v41 = vld [vmem:[%s0 + $0x8] sm:$0xff]
    %v42 = vld [vmem:[%s0 + $0x10] sm:$0xff]
    %v43 = vld [vmem:[%s0 + $0x18] sm:$0xff]
    %v44 = vld [vmem:[%s0 + $0x20] sm:$0xff]
    %v45 = vld [vmem:[%s0 + $0x28] sm:$0xff]
    %v46 = vld [vmem:[%s0 + $0x30] sm:$0xff]
    %v47 = vld [vmem:[%s0 + $0x38] sm:$0xff]
    %v48 = vld [vmem:[%s1] sm:$0xff]
    %v49 = vld [vmem:[%s1 + $0x8] sm:$0xff]
    %v50 = vld [vmem:[%s1 + $0x10] sm:$0xff]
    %v51 = vld [vmem:[%s1 + $0x18] sm:$0xff]
    %v52 = vld [vmem:[%s1 + $0x20] sm:$0xff]
    %v53 = vld [vmem:[%s1 + $0x28] sm:$0xff]
    %v54 = vld [vmem:[%s1 + $0x30] sm:$0xff]
    %v55 = vld [vmem:[%s1 + $0x38] sm:$0xff]
    %v56 = vld [vmem:[%s1 + $0x40] sm:$0xff]
    %v57 = vld [vmem:[%s1 + $0x48] sm:$0xff]
    %v58 = vld [vmem:[%s1 + $0x50] sm:$0xff]
    %v59 = vld [vmem:[%s1 + $0x58] sm:$0xff]
    %v60 = vld [vmem:[%s1 + $0x60] sm:$0xff]
    %v61 = vld [vmem:[%s1 + $0x68] sm:$0xff]
    %v62 = vld [vmem:[%s1 + $0x70] sm:$0xff]
    %v63 = vld [vmem:[%s1 + $0x78] sm:$0xff]
    %v64 = vld [vmem:[%s1 + $0x80] sm:$0xff]
    %v65 = vld [vmem:[%s1 + $0x88] sm:$0xff]
    %v66 = vld [vmem:[%s1 + $0x90] sm:$0xff]
    %v67 = vld [vmem:[%s1 + $0x98] sm:$0xff]
    %v68 = vld [vmem:[%s1 + $0xa0] sm:$0xff]
    %v69 = vld [vmem:[%s1 + $0xa8] sm:$0xff]
    %v70 = vld [vmem:[%s1 + $0xb0] sm:$0xff]
    %v71 = vld [vmem:[%s1 + $0xb8] sm:$0xff]
    %v72 = vld [vmem:[%s1 + $0xc0] sm:$0xff]
    %v73 = vld [vmem:[%s1 + $0xc8] sm:$0xff]
    %v74 = vld [vmem:[%s1 + $0xd0] sm:$0xff]
    %v75 = vld [vmem:[%s1 + $0xd8] sm:$0xff]
    %v76 = vld [vmem:[%s1 + $0xe0] sm:$0xff]
    %v77 = vld [vmem:[%s1 + $0xe8] sm:$0xff]
    %v78 = vld [vmem:[%s1 + $0xf0] sm:$0xff]
    %v79 = vld [vmem:[%s1 + $0xf8] sm:$0xff]
    %v80 = vld [vmem:[%s1 + $0x100] sm:$0xff]
    %v81 = vld [vmem:[%s1 + $0x108] sm:$0xff]
    %v82 = vld [vmem:[%s1 + $0x110] sm:$0xff]
    %v83 = vld [vmem:[%s1 + $0x118] sm:$0xff]
    %v84 = vld [vmem:[%s1 + $0x120] sm:$0xff]
    %v85 = vld [vmem:[%s1 + $0x128] sm:$0xff]
    %v86 = vld [vmem:[%s1 + $0x130] sm:$0xff]
    %v87 = vld [vmem:[%s1 + $0x138] sm:$0xff]
    %v88 = vld [vmem:[%s1 + $0x140] sm:$0xff]
    %v89 = vld [vmem:[%s1 + $0x148] sm:$0xff]
    %v90 = vld [vmem:[%s1 + $0x150] sm:$0xff]
    %v91 = vld [vmem:[%s1 + $0x158] sm:$0xff]
    %v92 = vld [vmem:[%s1 + $0x160] sm:$0xff]
    %v93 = vld [vmem:[%s1 + $0x168] sm:$0xff]
    %v94 = vld [vmem:[%s1 + $0x170] sm:$0xff]
    %v95 = vld [vmem:[%s1 + $0x178] sm:$0xff]
    %v96 = vld [vmem:[%s1 + $0x180] sm:$0xff]
    %v97 = vld [vmem:[%s1 + $0x188] sm:$0xff]
    %v98 = vld [vmem:[%s1 + $0x190] sm:$0xff]
    %v99 = vld [vmem:[%s1 + $0x198] sm:$0xff]
    %v100 = vld [vmem:[%s1 + $0x1a0] sm:$0xff]
    %v101 = vld [vmem:[%s1 + $0x1a8] sm:$0xff]
    %v102 = vld [vmem:[%s1 + $0x1b0] sm:$0xff]
    %v103 = vld [vmem:[%s1 + $0x1b8] sm:$0xff]
    %v104 = vld [vmem:[%s1 + $0x1c0] sm:$0xff]
    %v105 = vld [vmem:[%s1 + $0x1c8] sm:$0xff]
    %v106 = vld [vmem:[%s1 + $0x1d0] sm:$0xff]
    %v107 = vld [vmem:[%s1 + $0x1d8] sm:$0xff]
    %v108 = vld [vmem:[%s1 + $0x1e0] sm:$0xff]
    %v109 = vld [vmem:[%s1 + $0x1e8] sm:$0xff]
    %v110 = vld [vmem:[%s1 + $0x1f0] sm:$0xff]
    %v111 = vld [vmem:[%s1 + $0x1f8] sm:$0xff]
    %v112 = vld [vmem:[%s1 + $0x200] sm:$0xff]
    %v113 = vld [vmem:[%s1 + $0x208] sm:$0xff]
    %v114 = vld [vmem:[%s1 + $0x210] sm:$0xff]
    %v115 = vld [vmem:[%s1 + $0x218] sm:$0xff]
    %v116 = vld [vmem:[%s1 + $0x220] sm:$0xff]
    %v117 = vld [vmem:[%s1 + $0x228] sm:$0xff]
    %v118 = vld [vmem:[%s1 + $0x230] sm:$0xff]
    %v119 = vld [vmem:[%s1 + $0x238] sm:$0xff]
    %v120 = vld [vmem:[%s1 + $0x240] sm:$0xff]
    %v121 = vld [vmem:[%s1 + $0x248] sm:$0xff]
    %v122 = vld [vmem:[%s1 + $0x250] sm:$0xff]
    %v123 = vld [vmem:[%s1 + $0x258] sm:$0xff]
    %v124 = vld [vmem:[%s1 + $0x260] sm:$0xff]
    %v125 = vld [vmem:[%s1 + $0x268] sm:$0xff]
    %v126 = vld [vmem:[%s1 + $0x270] sm:$0xff]
    %v127 = vld [vmem:[%s1 + $0x278] sm:$0xff]
    %v128 = vld [vmem:[%s1 + $0x280] sm:$0xff]
    %v129 = vld [vmem:[%s1 + $0x288] sm:$0xff]
    %v130 = vld [vmem:[%s1 + $0x290] sm:$0xff]
    %v131 = vld [vmem:[%s1 + $0x298] sm:$0xff]
    %v132 = vld [vmem:[%s1 + $0x2a0] sm:$0xff]
    %v133 = vld [vmem:[%s1 + $0x2a8] sm:$0xff]
    %v134 = vld [vmem:[%s1 + $0x2b0] sm:$0xff]
    %v135 = vld [vmem:[%s1 + $0x2b8] sm:$0xff]
    %v136 = vld [vmem:[%s1 + $0x2c0] sm:$0xff]
    %v137 = vld [vmem:[%s1 + $0x2c8] sm:$0xff]
    %v138 = vld [vmem:[%s1 + $0x2d0] sm:$0xff]
    %v139 = vld [vmem:[%s1 + $0x2d8] sm:$0xff]
    %v140 = vld [vmem:[%s1 + $0x2e0] sm:$0xff]
    %v141 = vld [vmem:[%s1 + $0x2e8] sm:$0xff]
    %v142 = vld [vmem:[%s1 + $0x2f0] sm:$0xff]
    %v143 = vld [vmem:[%s1 + $0x2f8] sm:$0xff]
    %v144 = vld [vmem:[%s1 + $0x300] sm:$0xff]
    %v145 = vld [vmem:[%s1 + $0x308] sm:$0xff]
    %v146 = vld [vmem:[%s1 + $0x310] sm:$0xff]
    %v147 = vld [vmem:[%s1 + $0x318] sm:$0xff]
    %v148 = vld [vmem:[%s1 + $0x320] sm:$0xff]
    %v149 = vld [vmem:[%s1 + $0x328] sm:$0xff]
    %v150 = vld [vmem:[%s1 + $0x330] sm:$0xff]
    %v151 = vld [vmem:[%s1 + $0x338] sm:$0xff]
    %v152 = vld [vmem:[%s1 + $0x340] sm:$0xff]
    %v153 = vld [vmem:[%s1 + $0x348] sm:$0xff]
    %v154 = vld [vmem:[%s1 + $0x350] sm:$0xff]
    %v155 = vld [vmem:[%s1 + $0x358] sm:$0xff]
    %v156 = vld [vmem:[%s1 + $0x360] sm:$0xff]
    %v157 = vld [vmem:[%s1 + $0x368] sm:$0xff]
    %v158 = vld [vmem:[%s1 + $0x370] sm:$0xff]
    %v159 = vld [vmem:[%s1 + $0x378] sm:$0xff]
    %v160 = vld [vmem:[%s1 + $0x380] sm:$0xff]
    %v161 = vld [vmem:[%s1 + $0x388] sm:$0xff]
    %v162 = vld [vmem:[%s1 + $0x390] sm:$0xff]
    %v163 = vld [vmem:[%s1 + $0x398] sm:$0xff]
    %v164 = vld [vmem:[%s1 + $0x3a0] sm:$0xff]
    %v165 = vld [vmem:[%s1 + $0x3a8] sm:$0xff]
    %v166 = vld [vmem:[%s1 + $0x3b0] sm:$0xff]
    %v167 = vld [vmem:[%s1 + $0x3b8] sm:$0xff]
    %v168 = vld [vmem:[%s1 + $0x3c0] sm:$0xff]
    %v169 = vld [vmem:[%s1 + $0x3c8] sm:$0xff]
    %v170 = vld [vmem:[%s1 + $0x3d0] sm:$0xff]
    %v171 = vld [vmem:[%s1 + $0x3d8] sm:$0xff]
    %v172 = vld [vmem:[%s1 + $0x3e0] sm:$0xff]
    %v173 = vld [vmem:[%s1 + $0x3e8] sm:$0xff]
    %v174 = vld [vmem:[%s1 + $0x3f0] sm:$0xff]
    %v175 = vld [vmem:[%s1 + $0x3f8] sm:$0xff]
    %v176 = vld [vmem:[%s1 + $0x400] sm:$0xff]
    %v177 = vld [vmem:[%s1 + $0x408] sm:$0xff]
    %v178 = vld [vmem:[%s1 + $0x410] sm:$0xff]
    %v179 = vld [vmem:[%s1 + $0x418] sm:$0xff]
    %v180 = vld [vmem:[%s1 + $0x420] sm:$0xff]
    %v181 = vld [vmem:[%s1 + $0x428] sm:$0xff]
    %v182 = vld [vmem:[%s1 + $0x430] sm:$0xff]
    %v183 = vld [vmem:[%s1 + $0x438] sm:$0xff]
    %v184 = vld [vmem:[%s1 + $0x440] sm:$0xff]
    %v185 = vld [vmem:[%s1 + $0x448] sm:$0xff]
    %v186 = vld [vmem:[%s1 + $0x450] sm:$0xff]
    %v187 = vld [vmem:[%s1 + $0x458] sm:$0xff]
    %v188 = vld [vmem:[%s1 + $0x460] sm:$0xff]
    %v189 = vld [vmem:[%s1 + $0x468] sm:$0xff]
    %v190 = vld [vmem:[%s1 + $0x470] sm:$0xff]
    %v191 = vld [vmem:[%s1 + $0x478] sm:$0xff]
    %192 = vmatprep.subr.mxu0 %v41
    %193 = vmatpush1.xpose.msra.mxu0 %v40
    %194 = vmatprep.subr.mxu0 %v43
    %195 = vmatpush1.xpose.msra.mxu0 %v42
    %196 = vmatprep.subr.mxu0 %v45
    %197 = vmatpush1.xpose.msra.mxu0 %v44
    %198 = vmatprep.subr.mxu0 %v47
    %199 = vmatpush1.xpose.msra.mxu0 %v46
    %200 = vmatprep.subr.mxu0 0.0
    %201 = vmatpush1.xpose.msra.mxu0 0.0
    %202 = vmatprep.subr.mxu0 0.0
    %203 = vmatpush1.xpose.msra.mxu0 0.0
    %204 = vmatprep.subr.mxu0 0.0
    %205 = vmatpush1.xpose.msra.mxu0 0.0
    %206 = vmatprep.subr.mxu0 0.0
    %207 = vmatpush1.xpose.msra.mxu0 0.0
    %208 = vmatprep.subr.mxu0 0.0
    %209 = vmatpush1.xpose.msra.mxu0 0.0
    %210 = vmatprep.subr.mxu0 0.0
    %211 = vmatpush1.xpose.msra.mxu0 0.0
    %212 = vmatprep.subr.mxu0 0.0
    %213 = vmatpush1.xpose.msra.mxu0 0.0
    %214 = vmatprep.subr.mxu0 0.0
    %215 = vmatpush1.xpose.msra.mxu0 0.0
    %216 = vmatprep.subr.mxu0 0.0
    %217 = vmatpush1.xpose.msra.mxu0 0.0
    %218 = vmatprep.subr.mxu0 0.0
    %219 = vmatpush1.xpose.msra.mxu0 0.0
    %220 = vmatprep.subr.mxu0 0.0
    %221 = vmatpush1.xpose.msra.mxu0 0.0
    %222 = vmatprep.subr.mxu0 0.0
    %223 = vmatpush1.xpose.msra.mxu0 0.0
    %224 = vmatprep.subr.mxu0 0.0
    %225 = vmatpush1.xpose.msra.mxu0 0.0
    %226 = vmatprep.subr.mxu0 0.0
    %227 = vmatpush1.xpose.msra.mxu0 0.0
    %228 = vmatprep.subr.mxu0 0.0
    %229 = vmatpush1.xpose.msra.mxu0 0.0
    %230 = vmatprep.subr.mxu0 0.0
    %231 = vmatpush1.xpose.msra.mxu0 0.0
    %232 = vmatprep.subr.mxu0 0.0
    %233 = vmatpush1.xpose.msra.mxu0 0.0
    %234 = vmatprep.subr.mxu0 0.0
    %235 = vmatpush1.xpose.msra.mxu0 0.0
    %236 = vmatprep.subr.mxu0 0.0
    %237 = vmatpush1.xpose.msra.mxu0 0.0
    %238 = vmatprep.subr.mxu0 0.0
    %239 = vmatpush1.xpose.msra.mxu0 0.0
    %240 = vmatprep.subr.mxu0 0.0
    %241 = vmatpush1.xpose.msra.mxu0 0.0
    %242 = vmatprep.subr.mxu0 0.0
    %243 = vmatpush1.xpose.msra.mxu0 0.0
    %244 = vmatprep.subr.mxu0 0.0
    %245 = vmatpush1.xpose.msra.mxu0 0.0
    %246 = vmatprep.subr.mxu0 0.0
    %247 = vmatpush1.xpose.msra.mxu0 0.0
    %248 = vmatprep.subr.mxu0 0.0
    %249 = vmatpush1.xpose.msra.mxu0 0.0
    %250 = vmatprep.subr.mxu0 0.0
    %251 = vmatpush1.xpose.msra.mxu0 0.0
    %252 = vmatprep.subr.mxu0 0.0
    %253 = vmatpush1.xpose.msra.mxu0 0.0
    %254 = vmatprep.subr.mxu0 0.0
    %255 = vmatpush1.xpose.msra.mxu0 0.0
    %256 = vmatprep.mubr.f32.mxu0 %v49
    %257 = vmatmul.mubr.f32.gmra.mrb[0].mxu0 %v48
    %v258 = vpop.f32.mrb[0].mxu0
    %v259 = vadd.f32 0.0, %v258
    %v260 = vpop.f32.mrb[0].mxu0
    %261 = vmatprep.mubr.f32.mxu0 %v51
    %262 = vmatmul.mubr.f32.gmra.mrb[0].mxu0 %v50
    %v263 = vpop.f32.mrb[0].mxu0
    %v264 = vadd.f32 0.0, %v263
    %v265 = vpop.f32.mrb[0].mxu0
    %266 = vmatprep.mubr.f32.mxu0 %v53
    %267 = vmatmul.mubr.f32.gmra.mrb[0].mxu0 %v52
    %v268 = vpop.f32.mrb[0].mxu0
    %v269 = vadd.f32 0.0, %v268
    %v270 = vpop.f32.mrb[0].mxu0
    %271 = vmatprep.mubr.f32.mxu0 %v55
    %272 = vmatmul.mubr.f32.gmra.mrb[0].mxu0 %v54
    %v273 = vpop.f32.mrb[0].mxu0
    %v274 = vadd.f32 0.0, %v273
    %v275 = vpop.f32.mrb[0].mxu0
    %276 = vmatprep.mubr.f32.mxu0 %v57
    %277 = vmatmul.mubr.f32.gmra.mrb[0].mxu0 %v56
    %v278 = vpop.f32.mrb[0].mxu0
    %v279 = vadd.f32 0.0, %v278
    %v280 = vpop.f32.mrb[0].mxu0
    %281 = vmatprep.mubr.f32.mxu0 %v59
    %282 = vmatmul.mubr.f32.gmra.mrb[0].mxu0 %v58
    %v283 = vpop.f32.mrb[0].mxu0
    %v284 = vadd.f32 0.0, %v283
    %v285 = vpop.f32.mrb[0].mxu0
    %286 = vmatprep.mubr.f32.mxu0 %v61
    %287 = vmatmul.mubr.f32.gmra.mrb[0].mxu0 %v60
    %v288 = vpop.f32.mrb[0].mxu0
    %v289 = vadd.f32 0.0, %v288
    %v290 = vpop.f32.mrb[0].mxu0
    %291 = vmatprep.mubr.f32.mxu0 %v63
    %292 = vmatmul.mubr.f32.gmra.mrb[0].mxu0 %v62
    %v293 = vpop.f32.mrb[0].mxu0
    %v294 = vadd.f32 0.0, %v293
    %v295 = vpop.f32.mrb[0].mxu0
    %296 = vmatprep.mubr.f32.mxu0 %v65
    %297 = vmatmul.mubr.f32.gmra.mrb[0].mxu0 %v64
    %v298 = vpop.f32.mrb[0].mxu0
    %v299 = vadd.f32 0.0, %v298
    %v300 = vpop.f32.mrb[0].mxu0
    %301 = vmatprep.mubr.f32.mxu0 %v67
    %302 = vmatmul.mubr.f32.gmra.mrb[0].mxu0 %v66
    %v303 = vpop.f32.mrb[0].mxu0
    %v304 = vadd.f32 0.0, %v303
    %v305 = vpop.f32.mrb[0].mxu0
    %306 = vmatprep.mubr.f32.mxu0 %v69
    %307 = vmatmul.mubr.f32.gmra.mrb[0].mxu0 %v68
    %v308 = vpop.f32.mrb[0].mxu0
    %v309 = vadd.f32 0.0, %v308
    %v310 = vpop.f32.mrb[0].mxu0
    %311 = vmatprep.mubr.f32.mxu0 %v71
    %312 = vmatmul.mubr.f32.gmra.mrb[0].mxu0 %v70
    %v313 = vpop.f32.mrb[0].mxu0
    %v314 = vadd.f32 0.0, %v313
    %v315 = vpop.f32.mrb[0].mxu0
    %316 = vmatprep.mubr.f32.mxu0 %v73
    %317 = vmatmul.mubr.f32.gmra.mrb[0].mxu0 %v72
    %v318 = vpop.f32.mrb[0].mxu0
    %v319 = vadd.f32 0.0, %v318
    %v320 = vpop.f32.mrb[0].mxu0
    %321 = vmatprep.mubr.f32.mxu0 %v75
    %322 = vmatmul.mubr.f32.gmra.mrb[0].mxu0 %v74
    %v323 = vpop.f32.mrb[0].mxu0
    %v324 = vadd.f32 0.0, %v323
    %v325 = vpop.f32.mrb[0].mxu0
    %326 = vmatprep.mubr.f32.mxu0 %v77
    %327 = vmatmul.mubr.f32.gmra.mrb[0].mxu0 %v76
    %v328 = vpop.f32.mrb[0].mxu0
    %v329 = vadd.f32 0.0, %v328
    %v330 = vpop.f32.mrb[0].mxu0
    %331 = vmatprep.mubr.f32.mxu0 %v79
    %332 = vmatmul.mubr.f32.gmra.mrb[0].mxu0 %v78
    %v333 = vpop.f32.mrb[0].mxu0
    %v334 = vadd.f32 0.0, %v333
    %v335 = vpop.f32.mrb[0].mxu0
    %336 = vmatprep.mubr.f32.mxu0 %v81
    %337 = vmatmul.mubr.f32.gmra.mrb[0].mxu0 %v80
    %v338 = vpop.f32.mrb[0].mxu0
    %v339 = vadd.f32 0.0, %v338
    %v340 = vpop.f32.mrb[0].mxu0
    %341 = vmatprep.mubr.f32.mxu0 %v83
    %342 = vmatmul.mubr.f32.gmra.mrb[0].mxu0 %v82
    %v343 = vpop.f32.mrb[0].mxu0
    %v344 = vadd.f32 0.0, %v343
    %v345 = vpop.f32.mrb[0].mxu0
    %346 = vmatprep.mubr.f32.mxu0 %v85
    %347 = vmatmul.mubr.f32.gmra.mrb[0].mxu0 %v84
    %v348 = vpop.f32.mrb[0].mxu0
    %v349 = vadd.f32 0.0, %v348
    %v350 = vpop.f32.mrb[0].mxu0
    %351 = vmatprep.mubr.f32.mxu0 %v87
    %352 = vmatmul.mubr.f32.gmra.mrb[0].mxu0 %v86
    %v353 = vpop.f32.mrb[0].mxu0
    %v354 = vadd.f32 0.0, %v353
    %v355 = vpop.f32.mrb[0].mxu0
    %356 = vmatprep.mubr.f32.mxu0 %v89
    %357 = vmatmul.mubr.f32.gmra.mrb[0].mxu0 %v88
    %v358 = vpop.f32.mrb[0].mxu0
    %v359 = vadd.f32 0.0, %v358
    %v360 = vpop.f32.mrb[0].mxu0
    %361 = vmatprep.mubr.f32.mxu0 %v91
    %362 = vmatmul.mubr.f32.gmra.mrb[0].mxu0 %v90
    %v363 = vpop.f32.mrb[0].mxu0
    %v364 = vadd.f32 0.0, %v363
    %v365 = vpop.f32.mrb[0].mxu0
    %366 = vmatprep.mubr.f32.mxu0 %v93
    %367 = vmatmul.mubr.f32.gmra.mrb[0].mxu0 %v92
    %v368 = vpop.f32.mrb[0].mxu0
    %v369 = vadd.f32 0.0, %v368
    %v370 = vpop.f32.mrb[0].mxu0
    %371 = vmatprep.mubr.f32.mxu0 %v95
    %372 = vmatmul.mubr.f32.gmra.mrb[0].mxu0 %v94
    %v373 = vpop.f32.mrb[0].mxu0
    %v374 = vadd.f32 0.0, %v373
    %v375 = vpop.f32.mrb[0].mxu0
    %376 = vmatprep.mubr.f32.mxu0 %v97
    %377 = vmatmul.mubr.f32.gmra.mrb[0].mxu0 %v96
    %v378 = vpop.f32.mrb[0].mxu0
    %v379 = vadd.f32 0.0, %v378
    %v380 = vpop.f32.mrb[0].mxu0
    %381 = vmatprep.mubr.f32.mxu0 %v99
    %382 = vmatmul.mubr.f32.gmra.mrb[0].mxu0 %v98
    %v383 = vpop.f32.mrb[0].mxu0
    %v384 = vadd.f32 0.0, %v383
    %v385 = vpop.f32.mrb[0].mxu0
    %386 = vmatprep.mubr.f32.mxu0 %v101
    %387 = vmatmul.mubr.f32.gmra.mrb[0].mxu0 %v100
    %v388 = vpop.f32.mrb[0].mxu0
    %v389 = vadd.f32 0.0, %v388
    %v390 = vpop.f32.mrb[0].mxu0
    %391 = vmatprep.mubr.f32.mxu0 %v103
    %392 = vmatmul.mubr.f32.gmra.mrb[0].mxu0 %v102
    %v393 = vpop.f32.mrb[0].mxu0
    %v394 = vadd.f32 0.0, %v393
    %v395 = vpop.f32.mrb[0].mxu0
    %396 = vmatprep.mubr.f32.mxu0 %v105
    %397 = vmatmul.mubr.f32.gmra.mrb[0].mxu0 %v104
    %v398 = vpop.f32.mrb[0].mxu0
    %v399 = vadd.f32 0.0, %v398
    %v400 = vpop.f32.mrb[0].mxu0
    %401 = vmatprep.mubr.f32.mxu0 %v107
    %402 = vmatmul.mubr.f32.gmra.mrb[0].mxu0 %v106
    %v403 = vpop.f32.mrb[0].mxu0
    %v404 = vadd.f32 0.0, %v403
    %v405 = vpop.f32.mrb[0].mxu0
    %406 = vmatprep.mubr.f32.mxu0 %v109
    %407 = vmatmul.mubr.f32.gmra.mrb[0].mxu0 %v108
    %v408 = vpop.f32.mrb[0].mxu0
    %v409 = vadd.f32 0.0, %v408
    %v410 = vpop.f32.mrb[0].mxu0
    %411 = vmatprep.mubr.f32.mxu0 %v111
    %412 = vmatmul.mubr.f32.gmra.mrb[0].mxu0 %v110
    %v413 = vpop.f32.mrb[0].mxu0
    %v414 = vadd.f32 0.0, %v413
    %v415 = vpop.f32.mrb[0].mxu0
    %416 = vmatprep.mubr.f32.mxu0 %v113
    %417 = vmatmul.mubr.f32.gmra.mrb[0].mxu0 %v112
    %v418 = vpop.f32.mrb[0].mxu0
    %v419 = vadd.f32 0.0, %v418
    %v420 = vpop.f32.mrb[0].mxu0
    %421 = vmatprep.mubr.f32.mxu0 %v115
    %422 = vmatmul.mubr.f32.gmra.mrb[0].mxu0 %v114
    %v423 = vpop.f32.mrb[0].mxu0
    %v424 = vadd.f32 0.0, %v423
    %v425 = vpop.f32.mrb[0].mxu0
    %426 = vmatprep.mubr.f32.mxu0 %v117
    %427 = vmatmul.mubr.f32.gmra.mrb[0].mxu0 %v116
    %v428 = vpop.f32.mrb[0].mxu0
    %v429 = vadd.f32 0.0, %v428
    %v430 = vpop.f32.mrb[0].mxu0
    %431 = vmatprep.mubr.f32.mxu0 %v119
    %432 = vmatmul.mubr.f32.gmra.mrb[0].mxu0 %v118
    %v433 = vpop.f32.mrb[0].mxu0
    %v434 = vadd.f32 0.0, %v433
    %v435 = vpop.f32.mrb[0].mxu0
    %436 = vmatprep.mubr.f32.mxu0 %v121
    %437 = vmatmul.mubr.f32.gmra.mrb[0].mxu0 %v120
    %v438 = vpop.f32.mrb[0].mxu0
    %v439 = vadd.f32 0.0, %v438
    %v440 = vpop.f32.mrb[0].mxu0
    %441 = vmatprep.mubr.f32.mxu0 %v123
    %442 = vmatmul.mubr.f32.gmra.mrb[0].mxu0 %v122
    %v443 = vpop.f32.mrb[0].mxu0
    %v444 = vadd.f32 0.0, %v443
    %v445 = vpop.f32.mrb[0].mxu0
    %446 = vmatprep.mubr.f32.mxu0 %v125
    %447 = vmatmul.mubr.f32.gmra.mrb[0].mxu0 %v124
    %v448 = vpop.f32.mrb[0].mxu0
    %v449 = vadd.f32 0.0, %v448
    %v450 = vpop.f32.mrb[0].mxu0
    %451 = vmatprep.mubr.f32.mxu0 %v127
    %452 = vmatmul.mubr.f32.gmra.mrb[0].mxu0 %v126
    %v453 = vpop.f32.mrb[0].mxu0
    %v454 = vadd.f32 0.0, %v453
    %v455 = vpop.f32.mrb[0].mxu0
    %456 = vmatprep.mubr.f32.mxu0 %v129
    %457 = vmatmul.mubr.f32.gmra.mrb[0].mxu0 %v128
    %v458 = vpop.f32.mrb[0].mxu0
    %v459 = vadd.f32 0.0, %v458
    %v460 = vpop.f32.mrb[0].mxu0
    %461 = vmatprep.mubr.f32.mxu0 %v131
    %462 = vmatmul.mubr.f32.gmra.mrb[0].mxu0 %v130
    %v463 = vpop.f32.mrb[0].mxu0
    %v464 = vadd.f32 0.0, %v463
    %v465 = vpop.f32.mrb[0].mxu0
    %466 = vmatprep.mubr.f32.mxu0 %v133
    %467 = vmatmul.mubr.f32.gmra.mrb[0].mxu0 %v132
    %v468 = vpop.f32.mrb[0].mxu0
    %v469 = vadd.f32 0.0, %v468
    %v470 = vpop.f32.mrb[0].mxu0
    %471 = vmatprep.mubr.f32.mxu0 %v135
    %472 = vmatmul.mubr.f32.gmra.mrb[0].mxu0 %v134
    %v473 = vpop.f32.mrb[0].mxu0
    %v474 = vadd.f32 0.0, %v473
    %v475 = vpop.f32.mrb[0].mxu0
    %476 = vmatprep.mubr.f32.mxu0 %v137
    %477 = vmatmul.mubr.f32.gmra.mrb[0].mxu0 %v136
    %v478 = vpop.f32.mrb[0].mxu0
    %v479 = vadd.f32 0.0, %v478
    %v480 = vpop.f32.mrb[0].mxu0
    %481 = vmatprep.mubr.f32.mxu0 %v139
    %482 = vmatmul.mubr.f32.gmra.mrb[0].mxu0 %v138
    %v483 = vpop.f32.mrb[0].mxu0
    %v484 = vadd.f32 0.0, %v483
    %v485 = vpop.f32.mrb[0].mxu0
    %486 = vmatprep.mubr.f32.mxu0 %v141
    %487 = vmatmul.mubr.f32.gmra.mrb[0].mxu0 %v140
    %v488 = vpop.f32.mrb[0].mxu0
    %v489 = vadd.f32 0.0, %v488
    %v490 = vpop.f32.mrb[0].mxu0
    %491 = vmatprep.mubr.f32.mxu0 %v143
    %492 = vmatmul.mubr.f32.gmra.mrb[0].mxu0 %v142
    %v493 = vpop.f32.mrb[0].mxu0
    %v494 = vadd.f32 0.0, %v493
    %v495 = vpop.f32.mrb[0].mxu0
    %496 = vmatprep.mubr.f32.mxu0 %v145
    %497 = vmatmul.mubr.f32.gmra.mrb[0].mxu0 %v144
    %v498 = vpop.f32.mrb[0].mxu0
    %v499 = vadd.f32 0.0, %v498
    %v500 = vpop.f32.mrb[0].mxu0
    %501 = vmatprep.mubr.f32.mxu0 %v147
    %502 = vmatmul.mubr.f32.gmra.mrb[0].mxu0 %v146
    %v503 = vpop.f32.mrb[0].mxu0
    %v504 = vadd.f32 0.0, %v503
    %v505 = vpop.f32.mrb[0].mxu0
    %506 = vmatprep.mubr.f32.mxu0 %v149
    %507 = vmatmul.mubr.f32.gmra.mrb[0].mxu0 %v148
    %v508 = vpop.f32.mrb[0].mxu0
    %v509 = vadd.f32 0.0, %v508
    %v510 = vpop.f32.mrb[0].mxu0
    %511 = vmatprep.mubr.f32.mxu0 %v151
    %512 = vmatmul.mubr.f32.gmra.mrb[0].mxu0 %v150
    %v513 = vpop.f32.mrb[0].mxu0
    %v514 = vadd.f32 0.0, %v513
    %v515 = vpop.f32.mrb[0].mxu0
    %516 = vmatprep.mubr.f32.mxu0 %v153
    %517 = vmatmul.mubr.f32.gmra.mrb[0].mxu0 %v152
    %v518 = vpop.f32.mrb[0].mxu0
    %v519 = vadd.f32 0.0, %v518
    %v520 = vpop.f32.mrb[0].mxu0
    %521 = vmatprep.mubr.f32.mxu0 %v155
    %522 = vmatmul.mubr.f32.gmra.mrb[0].mxu0 %v154
    %v523 = vpop.f32.mrb[0].mxu0
    %v524 = vadd.f32 0.0, %v523
    %v525 = vpop.f32.mrb[0].mxu0
    %526 = vmatprep.mubr.f32.mxu0 %v157
    %527 = vmatmul.mubr.f32.gmra.mrb[0].mxu0 %v156
    %v528 = vpop.f32.mrb[0].mxu0
    %v529 = vadd.f32 0.0, %v528
    %v530 = vpop.f32.mrb[0].mxu0
    %531 = vmatprep.mubr.f32.mxu0 %v159
    %532 = vmatmul.mubr.f32.gmra.mrb[0].mxu0 %v158
    %v533 = vpop.f32.mrb[0].mxu0
    %v534 = vadd.f32 0.0, %v533
    %v535 = vpop.f32.mrb[0].mxu0
    %536 = vmatprep.mubr.f32.mxu0 %v161
    %537 = vmatmul.mubr.f32.gmra.mrb[0].mxu0 %v160
    %v538 = vpop.f32.mrb[0].mxu0
    %v539 = vadd.f32 0.0, %v538
    %v540 = vpop.f32.mrb[0].mxu0
    %541 = vmatprep.mubr.f32.mxu0 %v163
    %542 = vmatmul.mubr.f32.gmra.mrb[0].mxu0 %v162
    %v543 = vpop.f32.mrb[0].mxu0
    %v544 = vadd.f32 0.0, %v543
    %v545 = vpop.f32.mrb[0].mxu0
    %546 = vmatprep.mubr.f32.mxu0 %v165
    %547 = vmatmul.mubr.f32.gmra.mrb[0].mxu0 %v164
    %v548 = vpop.f32.mrb[0].mxu0
    %v549 = vadd.f32 0.0, %v548
    %v550 = vpop.f32.mrb[0].mxu0
    %551 = vmatprep.mubr.f32.mxu0 %v167
    %552 = vmatmul.mubr.f32.gmra.mrb[0].mxu0 %v166
    %v553 = vpop.f32.mrb[0].mxu0
    %v554 = vadd.f32 0.0, %v553
    %v555 = vpop.f32.mrb[0].mxu0
    %556 = vmatprep.mubr.f32.mxu0 %v169
    %557 = vmatmul.mubr.f32.gmra.mrb[0].mxu0 %v168
    %v558 = vpop.f32.mrb[0].mxu0
    %v559 = vadd.f32 0.0, %v558
    %v560 = vpop.f32.mrb[0].mxu0
    %561 = vmatprep.mubr.f32.mxu0 %v171
    %562 = vmatmul.mubr.f32.gmra.mrb[0].mxu0 %v170
    %v563 = vpop.f32.mrb[0].mxu0
    %v564 = vadd.f32 0.0, %v563
    %v565 = vpop.f32.mrb[0].mxu0
    %566 = vmatprep.mubr.f32.mxu0 %v173
    %567 = vmatmul.mubr.f32.gmra.mrb[0].mxu0 %v172
    %v568 = vpop.f32.mrb[0].mxu0
    %v569 = vadd.f32 0.0, %v568
    %v570 = vpop.f32.mrb[0].mxu0
    %571 = vmatprep.mubr.f32.mxu0 %v175
    %572 = vmatmul.mubr.f32.gmra.mrb[0].mxu0 %v174
    %v573 = vpop.f32.mrb[0].mxu0
    %v574 = vadd.f32 0.0, %v573
    %v575 = vpop.f32.mrb[0].mxu0
    %576 = vmatprep.mubr.f32.mxu0 %v177
    %577 = vmatmul.mubr.f32.gmra.mrb[0].mxu0 %v176
    %v578 = vpop.f32.mrb[0].mxu0
    %v579 = vadd.f32 0.0, %v578
    %v580 = vpop.f32.mrb[0].mxu0
    %581 = vmatprep.mubr.f32.mxu0 %v179
    %582 = vmatmul.mubr.f32.gmra.mrb[0].mxu0 %v178
    %v583 = vpop.f32.mrb[0].mxu0
    %v584 = vadd.f32 0.0, %v583
    %v585 = vpop.f32.mrb[0].mxu0
    %586 = vmatprep.mubr.f32.mxu0 %v181
    %587 = vmatmul.mubr.f32.gmra.mrb[0].mxu0 %v180
    %v588 = vpop.f32.mrb[0].mxu0
    %v589 = vadd.f32 0.0, %v588
    %v590 = vpop.f32.mrb[0].mxu0
    %591 = vmatprep.mubr.f32.mxu0 %v183
    %592 = vmatmul.mubr.f32.gmra.mrb[0].mxu0 %v182
    %v593 = vpop.f32.mrb[0].mxu0
    %v594 = vadd.f32 0.0, %v593
    %v595 = vpop.f32.mrb[0].mxu0
    %596 = vmatprep.mubr.f32.mxu0 %v185
    %597 = vmatmul.mubr.f32.gmra.mrb[0].mxu0 %v184
    %v598 = vpop.f32.mrb[0].mxu0
    %v599 = vadd.f32 0.0, %v598
    %v600 = vpop.f32.mrb[0].mxu0
    %601 = vmatprep.mubr.f32.mxu0 %v187
    %602 = vmatmul.mubr.f32.gmra.mrb[0].mxu0 %v186
    %v603 = vpop.f32.mrb[0].mxu0
    %v604 = vadd.f32 0.0, %v603
    %v605 = vpop.f32.mrb[0].mxu0
    %606 = vmatprep.mubr.f32.mxu0 %v189
    %607 = vmatmul.mubr.f32.gmra.mrb[0].mxu0 %v188
    %v608 = vpop.f32.mrb[0].mxu0
    %v609 = vadd.f32 0.0, %v608
    %v610 = vpop.f32.mrb[0].mxu0
    %611 = vmatprep.mubr.f32.mxu0 %v191
    %612 = vmatmul.mubr.f32.gmra.mrb[0].mxu0 %v190
    %v613 = vpop.f32.mrb[0].mxu0
    %v614 = vadd.f32 0.0, %v613
    %v615 = vpop.f32.mrb[0].mxu0
    %616 = vdwg.mxu0
    %625 = vrot.lane.b32.xlu0 %v299, 16
    %v626 = vpop.permute.xlu0 %625
    %627 = vrot.lane.b32.xlu0 %v304, 16
    %v628 = vpop.permute.xlu0 %627
    %629 = vrot.lane.b32.xlu0 %v309, 16
    %v630 = vpop.permute.xlu0 %629
    %631 = vrot.lane.b32.xlu0 %v314, 16
    %v632 = vpop.permute.xlu0 %631
    %633 = vrot.lane.b32.xlu0 %v319, 16
    %v634 = vpop.permute.xlu0 %633
    %635 = vrot.lane.b32.xlu0 %v324, 16
    %v636 = vpop.permute.xlu0 %635
    %637 = vrot.lane.b32.xlu0 %v329, 16
    %v638 = vpop.permute.xlu0 %637
    %639 = vrot.lane.b32.xlu0 %v334, 16
    %v640 = vpop.permute.xlu0 %639
    %657 = vrot.lane.b32.xlu0 %v339, 32
    %v658 = vpop.permute.xlu0 %657
    %659 = vrot.lane.b32.xlu0 %v344, 32
    %v660 = vpop.permute.xlu0 %659
    %661 = vrot.lane.b32.xlu0 %v349, 32
    %v662 = vpop.permute.xlu0 %661
    %663 = vrot.lane.b32.xlu0 %v354, 32
    %v664 = vpop.permute.xlu0 %663
    %665 = vrot.lane.b32.xlu0 %v359, 32
    %v666 = vpop.permute.xlu0 %665
    %667 = vrot.lane.b32.xlu0 %v364, 32
    %v668 = vpop.permute.xlu0 %667
    %669 = vrot.lane.b32.xlu0 %v369, 32
    %v670 = vpop.permute.xlu0 %669
    %671 = vrot.lane.b32.xlu0 %v374, 32
    %v672 = vpop.permute.xlu0 %671
    %689 = vrot.lane.b32.xlu0 %v379, 48
    %v690 = vpop.permute.xlu0 %689
    %691 = vrot.lane.b32.xlu0 %v384, 48
    %v692 = vpop.permute.xlu0 %691
    %693 = vrot.lane.b32.xlu0 %v389, 48
    %v694 = vpop.permute.xlu0 %693
    %695 = vrot.lane.b32.xlu0 %v394, 48
    %v696 = vpop.permute.xlu0 %695
    %697 = vrot.lane.b32.xlu0 %v399, 48
    %v698 = vpop.permute.xlu0 %697
    %699 = vrot.lane.b32.xlu0 %v404, 48
    %v700 = vpop.permute.xlu0 %699
    %701 = vrot.lane.b32.xlu0 %v409, 48
    %v702 = vpop.permute.xlu0 %701
    %703 = vrot.lane.b32.xlu0 %v414, 48
    %v704 = vpop.permute.xlu0 %703
    %721 = vrot.lane.b32.xlu0 %v419, 64
    %v722 = vpop.permute.xlu0 %721
    %723 = vrot.lane.b32.xlu0 %v424, 64
    %v724 = vpop.permute.xlu0 %723
    %725 = vrot.lane.b32.xlu0 %v429, 64
    %v726 = vpop.permute.xlu0 %725
    %727 = vrot.lane.b32.xlu0 %v434, 64
    %v728 = vpop.permute.xlu0 %727
    %729 = vrot.lane.b32.xlu0 %v439, 64
    %v730 = vpop.permute.xlu0 %729
    %731 = vrot.lane.b32.xlu0 %v444, 64
    %v732 = vpop.permute.xlu0 %731
    %733 = vrot.lane.b32.xlu0 %v449, 64
    %v734 = vpop.permute.xlu0 %733
    %735 = vrot.lane.b32.xlu0 %v454, 64
    %v736 = vpop.permute.xlu0 %735
    %753 = vrot.lane.b32.xlu0 %v459, 80
    %v754 = vpop.permute.xlu0 %753
    %755 = vrot.lane.b32.xlu0 %v464, 80
    %v756 = vpop.permute.xlu0 %755
    %757 = vrot.lane.b32.xlu0 %v469, 80
    %v758 = vpop.permute.xlu0 %757
    %759 = vrot.lane.b32.xlu0 %v474, 80
    %v760 = vpop.permute.xlu0 %759
    %761 = vrot.lane.b32.xlu0 %v479, 80
    %v762 = vpop.permute.xlu0 %761
    %763 = vrot.lane.b32.xlu0 %v484, 80
    %v764 = vpop.permute.xlu0 %763
    %765 = vrot.lane.b32.xlu0 %v489, 80
    %v766 = vpop.permute.xlu0 %765
    %767 = vrot.lane.b32.xlu0 %v494, 80
    %v768 = vpop.permute.xlu0 %767
    %785 = vrot.lane.b32.xlu0 %v499, 96
    %v786 = vpop.permute.xlu0 %785
    %787 = vrot.lane.b32.xlu0 %v504, 96
    %v788 = vpop.permute.xlu0 %787
    %789 = vrot.lane.b32.xlu0 %v509, 96
    %v790 = vpop.permute.xlu0 %789
    %791 = vrot.lane.b32.xlu0 %v514, 96
    %v792 = vpop.permute.xlu0 %791
    %793 = vrot.lane.b32.xlu0 %v519, 96
    %v794 = vpop.permute.xlu0 %793
    %795 = vrot.lane.b32.xlu0 %v524, 96
    %v796 = vpop.permute.xlu0 %795
    %797 = vrot.lane.b32.xlu0 %v529, 96
    %v798 = vpop.permute.xlu0 %797
    %799 = vrot.lane.b32.xlu0 %v534, 96
    %v800 = vpop.permute.xlu0 %799
    %817 = vrot.lane.b32.xlu0 %v539, 112
    %v818 = vpop.permute.xlu0 %817
    %819 = vrot.lane.b32.xlu0 %v544, 112
    %v820 = vpop.permute.xlu0 %819
    %821 = vrot.lane.b32.xlu0 %v549, 112
    %v822 = vpop.permute.xlu0 %821
    %823 = vrot.lane.b32.xlu0 %v554, 112
    %v824 = vpop.permute.xlu0 %823
    %825 = vrot.lane.b32.xlu0 %v559, 112
    %v826 = vpop.permute.xlu0 %825
    %827 = vrot.lane.b32.xlu0 %v564, 112
    %v828 = vpop.permute.xlu0 %827
    %829 = vrot.lane.b32.xlu0 %v569, 112
    %v830 = vpop.permute.xlu0 %829
    %831 = vrot.lane.b32.xlu0 %v574, 112
    %v832 = vpop.permute.xlu0 %831
    %vm841 = vcmask 130048
    %v842 = vsel %vm841, %v259, %v626
    %v843 = vsel %vm841, %v264, %v628
    %v844 = vsel %vm841, %v269, %v630
    %v845 = vsel %vm841, %v274, %v632
    %v846 = vsel %vm841, %v279, %v634
    %v847 = vsel %vm841, %v284, %v636
    %v848 = vsel %vm841, %v289, %v638
    %v849 = vsel %vm841, %v294, %v640
    %vm850 = vcmask 261120
    %v851 = vsel %vm850, %v842, %v658
    %v852 = vsel %vm850, %v843, %v660
    %v853 = vsel %vm850, %v844, %v662
    %v854 = vsel %vm850, %v845, %v664
    %v855 = vsel %vm850, %v846, %v666
    %v856 = vsel %vm850, %v847, %v668
    %v857 = vsel %vm850, %v848, %v670
    %v858 = vsel %vm850, %v849, %v672
    %vm859 = vcmask 392192
    %v860 = vsel %vm859, %v851, %v690
    %v861 = vsel %vm859, %v852, %v692
    %v862 = vsel %vm859, %v853, %v694
    %v863 = vsel %vm859, %v854, %v696
    %v864 = vsel %vm859, %v855, %v698
    %v865 = vsel %vm859, %v856, %v700
    %v866 = vsel %vm859, %v857, %v702
    %v867 = vsel %vm859, %v858, %v704
    %vm868 = vcmask 523264
    %v869 = vsel %vm868, %v860, %v722
    %v870 = vsel %vm868, %v861, %v724
    %v871 = vsel %vm868, %v862, %v726
    %v872 = vsel %vm868, %v863, %v728
    %v873 = vsel %vm868, %v864, %v730
    %v874 = vsel %vm868, %v865, %v732
    %v875 = vsel %vm868, %v866, %v734
    %v876 = vsel %vm868, %v867, %v736
    %vm877 = vcmask 654336
    %v878 = vsel %vm877, %v869, %v754
    %v879 = vsel %vm877, %v870, %v756
    %v880 = vsel %vm877, %v871, %v758
    %v881 = vsel %vm877, %v872, %v760
    %v882 = vsel %vm877, %v873, %v762
    %v883 = vsel %vm877, %v874, %v764
    %v884 = vsel %vm877, %v875, %v766
    %v885 = vsel %vm877, %v876, %v768
    %vm886 = vcmask 785408
    %v887 = vsel %vm886, %v878, %v786
    %v888 = vsel %vm886, %v879, %v788
    %v889 = vsel %vm886, %v880, %v790
    %v890 = vsel %vm886, %v881, %v792
    %v891 = vsel %vm886, %v882, %v794
    %v892 = vsel %vm886, %v883, %v796
    %v893 = vsel %vm886, %v884, %v798
    %v894 = vsel %vm886, %v885, %v800
    %vm895 = vcmask 916480
    %v896 = vsel %vm895, %v887, %v818
    %v897 = vsel %vm895, %v888, %v820
    %v898 = vsel %vm895, %v889, %v822
    %v899 = vsel %vm895, %v890, %v824
    %v900 = vsel %vm895, %v891, %v826
    %v901 = vsel %vm895, %v892, %v828
    %v902 = vsel %vm895, %v893, %v830
    %v903 = vsel %vm895, %v894, %v832
    %912 = vrot.lane.b32.xlu0 %v259, 112
    %v913 = vpop.permute.xlu0 %912
    %914 = vrot.lane.b32.xlu0 %v264, 112
    %v915 = vpop.permute.xlu0 %914
    %916 = vrot.lane.b32.xlu0 %v269, 112
    %v917 = vpop.permute.xlu0 %916
    %918 = vrot.lane.b32.xlu0 %v274, 112
    %v919 = vpop.permute.xlu0 %918
    %920 = vrot.lane.b32.xlu0 %v279, 112
    %v921 = vpop.permute.xlu0 %920
    %922 = vrot.lane.b32.xlu0 %v284, 112
    %v923 = vpop.permute.xlu0 %922
    %924 = vrot.lane.b32.xlu0 %v289, 112
    %v925 = vpop.permute.xlu0 %924
    %926 = vrot.lane.b32.xlu0 %v294, 112
    %v927 = vpop.permute.xlu0 %926
    %936 = vrot.lane.b32.xlu0 %v339, 16
    %v937 = vpop.permute.xlu0 %936
    %938 = vrot.lane.b32.xlu0 %v344, 16
    %v939 = vpop.permute.xlu0 %938
    %940 = vrot.lane.b32.xlu0 %v349, 16
    %v941 = vpop.permute.xlu0 %940
    %942 = vrot.lane.b32.xlu0 %v354, 16
    %v943 = vpop.permute.xlu0 %942
    %944 = vrot.lane.b32.xlu0 %v359, 16
    %v945 = vpop.permute.xlu0 %944
    %946 = vrot.lane.b32.xlu0 %v364, 16
    %v947 = vpop.permute.xlu0 %946
    %948 = vrot.lane.b32.xlu0 %v369, 16
    %v949 = vpop.permute.xlu0 %948
    %950 = vrot.lane.b32.xlu0 %v374, 16
    %v951 = vpop.permute.xlu0 %950
    %960 = vrot.lane.b32.xlu0 %v379, 32
    %v961 = vpop.permute.xlu0 %960
    %962 = vrot.lane.b32.xlu0 %v384, 32
    %v963 = vpop.permute.xlu0 %962
    %964 = vrot.lane.b32.xlu0 %v389, 32
    %v965 = vpop.permute.xlu0 %964
    %966 = vrot.lane.b32.xlu0 %v394, 32
    %v967 = vpop.permute.xlu0 %966
    %968 = vrot.lane.b32.xlu0 %v399, 32
    %v969 = vpop.permute.xlu0 %968
    %970 = vrot.lane.b32.xlu0 %v404, 32
    %v971 = vpop.permute.xlu0 %970
    %972 = vrot.lane.b32.xlu0 %v409, 32
    %v973 = vpop.permute.xlu0 %972
    %974 = vrot.lane.b32.xlu0 %v414, 32
    %v975 = vpop.permute.xlu0 %974
    %984 = vrot.lane.b32.xlu0 %v419, 48
    %v985 = vpop.permute.xlu0 %984
    %986 = vrot.lane.b32.xlu0 %v424, 48
    %v987 = vpop.permute.xlu0 %986
    %988 = vrot.lane.b32.xlu0 %v429, 48
    %v989 = vpop.permute.xlu0 %988
    %990 = vrot.lane.b32.xlu0 %v434, 48
    %v991 = vpop.permute.xlu0 %990
    %992 = vrot.lane.b32.xlu0 %v439, 48
    %v993 = vpop.permute.xlu0 %992
    %994 = vrot.lane.b32.xlu0 %v444, 48
    %v995 = vpop.permute.xlu0 %994
    %996 = vrot.lane.b32.xlu0 %v449, 48
    %v997 = vpop.permute.xlu0 %996
    %998 = vrot.lane.b32.xlu0 %v454, 48
    %v999 = vpop.permute.xlu0 %998
    %1008 = vrot.lane.b32.xlu0 %v459, 64
    %v1009 = vpop.permute.xlu0 %1008
    %1010 = vrot.lane.b32.xlu0 %v464, 64
    %v1011 = vpop.permute.xlu0 %1010
    %1012 = vrot.lane.b32.xlu0 %v469, 64
    %v1013 = vpop.permute.xlu0 %1012
    %1014 = vrot.lane.b32.xlu0 %v474, 64
    %v1015 = vpop.permute.xlu0 %1014
    %1016 = vrot.lane.b32.xlu0 %v479, 64
    %v1017 = vpop.permute.xlu0 %1016
    %1018 = vrot.lane.b32.xlu0 %v484, 64
    %v1019 = vpop.permute.xlu0 %1018
    %1020 = vrot.lane.b32.xlu0 %v489, 64
    %v1021 = vpop.permute.xlu0 %1020
    %1022 = vrot.lane.b32.xlu0 %v494, 64
    %v1023 = vpop.permute.xlu0 %1022
    %1032 = vrot.lane.b32.xlu0 %v499, 80
    %v1033 = vpop.permute.xlu0 %1032
    %1034 = vrot.lane.b32.xlu0 %v504, 80
    %v1035 = vpop.permute.xlu0 %1034
    %1036 = vrot.lane.b32.xlu0 %v509, 80
    %v1037 = vpop.permute.xlu0 %1036
    %1038 = vrot.lane.b32.xlu0 %v514, 80
    %v1039 = vpop.permute.xlu0 %1038
    %1040 = vrot.lane.b32.xlu0 %v519, 80
    %v1041 = vpop.permute.xlu0 %1040
    %1042 = vrot.lane.b32.xlu0 %v524, 80
    %v1043 = vpop.permute.xlu0 %1042
    %1044 = vrot.lane.b32.xlu0 %v529, 80
    %v1045 = vpop.permute.xlu0 %1044
    %1046 = vrot.lane.b32.xlu0 %v534, 80
    %v1047 = vpop.permute.xlu0 %1046
    %1056 = vrot.lane.b32.xlu0 %v539, 96
    %v1057 = vpop.permute.xlu0 %1056
    %1058 = vrot.lane.b32.xlu0 %v544, 96
    %v1059 = vpop.permute.xlu0 %1058
    %1060 = vrot.lane.b32.xlu0 %v549, 96
    %v1061 = vpop.permute.xlu0 %1060
    %1062 = vrot.lane.b32.xlu0 %v554, 96
    %v1063 = vpop.permute.xlu0 %1062
    %1064 = vrot.lane.b32.xlu0 %v559, 96
    %v1065 = vpop.permute.xlu0 %1064
    %1066 = vrot.lane.b32.xlu0 %v564, 96
    %v1067 = vpop.permute.xlu0 %1066
    %1068 = vrot.lane.b32.xlu0 %v569, 96
    %v1069 = vpop.permute.xlu0 %1068
    %1070 = vrot.lane.b32.xlu0 %v574, 96
    %v1071 = vpop.permute.xlu0 %1070
    %1088 = vrot.lane.b32.xlu0 %v579, 112
    %v1089 = vpop.permute.xlu0 %1088
    %1090 = vrot.lane.b32.xlu0 %v584, 112
    %v1091 = vpop.permute.xlu0 %1090
    %1092 = vrot.lane.b32.xlu0 %v589, 112
    %v1093 = vpop.permute.xlu0 %1092
    %1094 = vrot.lane.b32.xlu0 %v594, 112
    %v1095 = vpop.permute.xlu0 %1094
    %1096 = vrot.lane.b32.xlu0 %v599, 112
    %v1097 = vpop.permute.xlu0 %1096
    %1098 = vrot.lane.b32.xlu0 %v604, 112
    %v1099 = vpop.permute.xlu0 %1098
    %1100 = vrot.lane.b32.xlu0 %v609, 112
    %v1101 = vpop.permute.xlu0 %1100
    %1102 = vrot.lane.b32.xlu0 %v614, 112
    %v1103 = vpop.permute.xlu0 %1102
    %v1104 = vsel %vm841, %v913, %v299
    %v1105 = vsel %vm841, %v915, %v304
    %v1106 = vsel %vm841, %v917, %v309
    %v1107 = vsel %vm841, %v919, %v314
    %v1108 = vsel %vm841, %v921, %v319
    %v1109 = vsel %vm841, %v923, %v324
    %v1110 = vsel %vm841, %v925, %v329
    %v1111 = vsel %vm841, %v927, %v334
    %v1112 = vsel %vm850, %v1104, %v937
    %v1113 = vsel %vm850, %v1105, %v939
    %v1114 = vsel %vm850, %v1106, %v941
    %v1115 = vsel %vm850, %v1107, %v943
    %v1116 = vsel %vm850, %v1108, %v945
    %v1117 = vsel %vm850, %v1109, %v947
    %v1118 = vsel %vm850, %v1110, %v949
    %v1119 = vsel %vm850, %v1111, %v951
    %v1120 = vsel %vm859, %v1112, %v961
    %v1121 = vsel %vm859, %v1113, %v963
    %v1122 = vsel %vm859, %v1114, %v965
    %v1123 = vsel %vm859, %v1115, %v967
    %v1124 = vsel %vm859, %v1116, %v969
    %v1125 = vsel %vm859, %v1117, %v971
    %v1126 = vsel %vm859, %v1118, %v973
    %v1127 = vsel %vm859, %v1119, %v975
    %v1128 = vsel %vm868, %v1120, %v985
    %v1129 = vsel %vm868, %v1121, %v987
    %v1130 = vsel %vm868, %v1122, %v989
    %v1131 = vsel %vm868, %v1123, %v991
    %v1132 = vsel %vm868, %v1124, %v993
    %v1133 = vsel %vm868, %v1125, %v995
    %v1134 = vsel %vm868, %v1126, %v997
    %v1135 = vsel %vm868, %v1127, %v999
    %v1136 = vsel %vm877, %v1128, %v1009
    %v1137 = vsel %vm877, %v1129, %v1011
    %v1138 = vsel %vm877, %v1130, %v1013
    %v1139 = vsel %vm877, %v1131, %v1015
    %v1140 = vsel %vm877, %v1132, %v1017
    %v1141 = vsel %vm877, %v1133, %v1019
    %v1142 = vsel %vm877, %v1134, %v1021
    %v1143 = vsel %vm877, %v1135, %v1023
    %v1144 = vsel %vm886, %v1136, %v1033
    %v1145 = vsel %vm886, %v1137, %v1035
    %v1146 = vsel %vm886, %v1138, %v1037
    %v1147 = vsel %vm886, %v1139, %v1039
    %v1148 = vsel %vm886, %v1140, %v1041
    %v1149 = vsel %vm886, %v1141, %v1043
    %v1150 = vsel %vm886, %v1142, %v1045
    %v1151 = vsel %vm886, %v1143, %v1047
    %v1152 = vsel %vm895, %v1144, %v1057
    %v1153 = vsel %vm895, %v1145, %v1059
    %v1154 = vsel %vm895, %v1146, %v1061
    %v1155 = vsel %vm895, %v1147, %v1063
    %v1156 = vsel %vm895, %v1148, %v1065
    %v1157 = vsel %vm895, %v1149, %v1067
    %v1158 = vsel %vm895, %v1150, %v1069
    %v1159 = vsel %vm895, %v1151, %v1071
    %v1160 = vld [vmem:[%s2] sm:$0xff]
    %v1161 = vld [vmem:[%s2 + $0x8] sm:$0xff]
    %v1162 = vld [vmem:[%s2 + $0x10] sm:$0xff]
    %v1163 = vld [vmem:[%s2 + $0x18] sm:$0xff]
    %v1164 = vld [vmem:[%s2 + $0x20] sm:$0xff]
    %v1165 = vld [vmem:[%s2 + $0x28] sm:$0xff]
    %v1166 = vld [vmem:[%s2 + $0x30] sm:$0xff]
    %v1167 = vld [vmem:[%s2 + $0x38] sm:$0xff]
    %v1168 = vld [vmem:[%s2 + $0x40] sm:$0xff]
    %v1169 = vld [vmem:[%s2 + $0x48] sm:$0xff]
    %v1170 = vld [vmem:[%s2 + $0x50] sm:$0xff]
    %v1171 = vld [vmem:[%s2 + $0x58] sm:$0xff]
    %v1172 = vld [vmem:[%s2 + $0x60] sm:$0xff]
    %v1173 = vld [vmem:[%s2 + $0x68] sm:$0xff]
    %v1174 = vld [vmem:[%s2 + $0x70] sm:$0xff]
    %v1175 = vld [vmem:[%s2 + $0x78] sm:$0xff]
    %v1176 = vld [vmem:[%s2 + $0x80] sm:$0xff]
    %v1177 = vld [vmem:[%s2 + $0x88] sm:$0xff]
    %v1178 = vsel %vm841, %v579, 0
    %v1180 = vsel %vm841, %v584, 0
    %v1182 = vsel %vm841, %v589, 0
    %v1184 = vsel %vm841, %v594, 0
    %v1186 = vsel %vm841, %v599, 0
    %v1188 = vsel %vm841, %v604, 0
    %v1190 = vsel %vm841, %v609, 0
    %v1192 = vsel %vm841, %v614, 0
    %v1194 = vsel %vm841, %v1089, 0
    %v1196 = vsel %vm841, %v1091, 0
    %v1198 = vsel %vm841, %v1093, 0
    %v1200 = vsel %vm841, %v1095, 0
    %v1202 = vsel %vm841, %v1097, 0
    %v1204 = vsel %vm841, %v1099, 0
    %v1206 = vsel %vm841, %v1101, 0
    %v1208 = vsel %vm841, %v1103, 0
    %1210 = vmatprep.subr.mxu0 0.0
    %1211 = vmatpush1.msra.mxu0 %v1160
    %1212 = vmatprep.subr.mxu0 0.0
    %1213 = vmatpush1.msra.mxu0 %v1161
    %1214 = vmatprep.subr.mxu0 0.0
    %1215 = vmatpush1.msra.mxu0 %v1162
    %1216 = vmatprep.subr.mxu0 0.0
    %1217 = vmatpush1.msra.mxu0 %v1163
    %1218 = vmatprep.subr.mxu0 0.0
    %1219 = vmatpush1.msra.mxu0 %v1164
    %1220 = vmatprep.subr.mxu0 0.0
    %1221 = vmatpush1.msra.mxu0 %v1165
    %1222 = vmatprep.subr.mxu0 0.0
    %1223 = vmatpush1.msra.mxu0 %v1166
    %1224 = vmatprep.subr.mxu0 0.0
    %1225 = vmatpush1.msra.mxu0 %v1167
    %1226 = vmatprep.subr.mxu0 0.0
    %1227 = vmatpush1.msra.mxu0 %v1168
    %1228 = vmatprep.subr.mxu0 0.0
    %1229 = vmatpush1.msra.mxu0 %v1169
    %1230 = vmatprep.subr.mxu0 0.0
    %1231 = vmatpush1.msra.mxu0 %v1170
    %1232 = vmatprep.subr.mxu0 0.0
    %1233 = vmatpush1.msra.mxu0 %v1171
    %1234 = vmatprep.subr.mxu0 0.0
    %1235 = vmatpush1.msra.mxu0 %v1172
    %1236 = vmatprep.subr.mxu0 0.0
    %1237 = vmatpush1.msra.mxu0 %v1173
    %1238 = vmatprep.subr.mxu0 0.0
    %1239 = vmatpush1.msra.mxu0 %v1174
    %1240 = vmatprep.subr.mxu0 0.0
    %1241 = vmatpush1.msra.mxu0 %v1175
    %1242 = vmatprep.subr.mxu0 0.0
    %1243 = vmatpush1.msra.mxu0 %v1176
    %1244 = vmatprep.subr.mxu0 0.0
    %1245 = vmatpush1.msra.mxu0 %v1177
    %1246 = vmatprep.subr.mxu0 0.0
    %1247 = vmatpush1.msra.mxu0 0.0
    %1248 = vmatprep.subr.mxu0 0.0
    %1249 = vmatpush1.msra.mxu0 0.0
    %1250 = vmatprep.subr.mxu0 0.0
    %1251 = vmatpush1.msra.mxu0 0.0
    %1252 = vmatprep.subr.mxu0 0.0
    %1253 = vmatpush1.msra.mxu0 0.0
    %1254 = vmatprep.subr.mxu0 0.0
    %1255 = vmatpush1.msra.mxu0 0.0
    %1256 = vmatprep.subr.mxu0 0.0
    %1257 = vmatpush1.msra.mxu0 0.0
    %1258 = vmatprep.subr.mxu0 0.0
    %1259 = vmatpush1.msra.mxu0 0.0
    %1260 = vmatprep.subr.mxu0 0.0
    %1261 = vmatpush1.msra.mxu0 0.0
    %1262 = vmatprep.subr.mxu0 0.0
    %1263 = vmatpush1.msra.mxu0 0.0
    %1264 = vmatprep.subr.mxu0 0.0
    %1265 = vmatpush1.msra.mxu0 0.0
    %1266 = vmatprep.subr.mxu0 0.0
    %1267 = vmatpush1.msra.mxu0 0.0
    %1268 = vmatprep.subr.mxu0 0.0
    %1269 = vmatpush1.msra.mxu0 0.0
    %1270 = vmatprep.subr.mxu0 0.0
    %1271 = vmatpush1.msra.mxu0 0.0
    %1272 = vmatprep.subr.mxu0 0.0
    %1273 = vmatpush1.msra.mxu0 0.0
    %1274 = vmatprep.mubr.f32.mxu0 %v1178
    %1275 = vmatmul.mubr.f32.gmra.mrb[0].mxu0 %v896
    %v1276 = vpop.f32.mrb[0].mxu0
    %v1277 = vadd.f32 0.0, %v1276
    %v1278 = vpop.f32.mrb[0].mxu0
    %1279 = vmatprep.mubr.f32.mxu0 %v1180
    %1280 = vmatmul.mubr.f32.gmra.mrb[0].mxu0 %v897
    %v1281 = vpop.f32.mrb[0].mxu0
    %v1282 = vadd.f32 0.0, %v1281
    %v1283 = vpop.f32.mrb[0].mxu0
    %1284 = vmatprep.mubr.f32.mxu0 %v1182
    %1285 = vmatmul.mubr.f32.gmra.mrb[0].mxu0 %v898
    %v1286 = vpop.f32.mrb[0].mxu0
    %v1287 = vadd.f32 0.0, %v1286
    %v1288 = vpop.f32.mrb[0].mxu0
    %1289 = vmatprep.mubr.f32.mxu0 %v1184
    %1290 = vmatmul.mubr.f32.gmra.mrb[0].mxu0 %v899
    %v1291 = vpop.f32.mrb[0].mxu0
    %v1292 = vadd.f32 0.0, %v1291
    %v1293 = vpop.f32.mrb[0].mxu0
    %1294 = vmatprep.mubr.f32.mxu0 %v1186
    %1295 = vmatmul.mubr.f32.gmra.mrb[0].mxu0 %v900
    %v1296 = vpop.f32.mrb[0].mxu0
    %v1297 = vadd.f32 0.0, %v1296
    %v1298 = vpop.f32.mrb[0].mxu0
    %1299 = vmatprep.mubr.f32.mxu0 %v1188
    %1300 = vmatmul.mubr.f32.gmra.mrb[0].mxu0 %v901
    %v1301 = vpop.f32.mrb[0].mxu0
    %v1302 = vadd.f32 0.0, %v1301
    %v1303 = vpop.f32.mrb[0].mxu0
    %1304 = vmatprep.mubr.f32.mxu0 %v1190
    %1305 = vmatmul.mubr.f32.gmra.mrb[0].mxu0 %v902
    %v1306 = vpop.f32.mrb[0].mxu0
    %v1307 = vadd.f32 0.0, %v1306
    %v1308 = vpop.f32.mrb[0].mxu0
    %1309 = vmatprep.mubr.f32.mxu0 %v1192
    %1310 = vmatmul.mubr.f32.gmra.mrb[0].mxu0 %v903
    %v1311 = vpop.f32.mrb[0].mxu0
    %v1312 = vadd.f32 0.0, %v1311
    %v1313 = vpop.f32.mrb[0].mxu0
    %1314 = vmatprep.mubr.f32.mxu0 %v1194
    %1315 = vmatmul.mubr.f32.gmra.mrb[0].mxu0 %v1152
    %v1316 = vpop.f32.mrb[0].mxu0
    %v1317 = vadd.f32 0.0, %v1316
    %v1318 = vpop.f32.mrb[0].mxu0
    %1319 = vmatprep.mubr.f32.mxu0 %v1196
    %1320 = vmatmul.mubr.f32.gmra.mrb[0].mxu0 %v1153
    %v1321 = vpop.f32.mrb[0].mxu0
    %v1322 = vadd.f32 0.0, %v1321
    %v1323 = vpop.f32.mrb[0].mxu0
    %1324 = vmatprep.mubr.f32.mxu0 %v1198
    %1325 = vmatmul.mubr.f32.gmra.mrb[0].mxu0 %v1154
    %v1326 = vpop.f32.mrb[0].mxu0
    %v1327 = vadd.f32 0.0, %v1326
    %v1328 = vpop.f32.mrb[0].mxu0
    %1329 = vmatprep.mubr.f32.mxu0 %v1200
    %1330 = vmatmul.mubr.f32.gmra.mrb[0].mxu0 %v1155
    %v1331 = vpop.f32.mrb[0].mxu0
    %v1332 = vadd.f32 0.0, %v1331
    %v1333 = vpop.f32.mrb[0].mxu0
    %1334 = vmatprep.mubr.f32.mxu0 %v1202
    %1335 = vmatmul.mubr.f32.gmra.mrb[0].mxu0 %v1156
    %v1336 = vpop.f32.mrb[0].mxu0
    %v1337 = vadd.f32 0.0, %v1336
    %v1338 = vpop.f32.mrb[0].mxu0
    %1339 = vmatprep.mubr.f32.mxu0 %v1204
    %1340 = vmatmul.mubr.f32.gmra.mrb[0].mxu0 %v1157
    %v1341 = vpop.f32.mrb[0].mxu0
    %v1342 = vadd.f32 0.0, %v1341
    %v1343 = vpop.f32.mrb[0].mxu0
    %1344 = vmatprep.mubr.f32.mxu0 %v1206
    %1345 = vmatmul.mubr.f32.gmra.mrb[0].mxu0 %v1158
    %v1346 = vpop.f32.mrb[0].mxu0
    %v1347 = vadd.f32 0.0, %v1346
    %v1348 = vpop.f32.mrb[0].mxu0
    %1349 = vmatprep.mubr.f32.mxu0 %v1208
    %1350 = vmatmul.mubr.f32.gmra.mrb[0].mxu0 %v1159
    %v1351 = vpop.f32.mrb[0].mxu0
    %v1352 = vadd.f32 0.0, %v1351
    %v1353 = vpop.f32.mrb[0].mxu0
    %1354 = vdwg.mxu0
    %v1355 = vsel %vm850, %v1277, 0.0
    %v1356 = vsel %vm850, %v1282, 0.0
    %v1357 = vadd.f32 %v1355, %v1356
    %v1358 = vsel %vm850, %v1287, 0.0
    %v1359 = vadd.f32 %v1357, %v1358
    %v1360 = vsel %vm850, %v1292, 0.0
    %v1361 = vadd.f32 %v1359, %v1360
    %v1362 = vsel %vm850, %v1297, 0.0
    %v1363 = vadd.f32 %v1361, %v1362
    %v1364 = vsel %vm850, %v1302, 0.0
    %v1365 = vadd.f32 %v1363, %v1364
    %v1366 = vsel %vm850, %v1307, 0.0
    %v1367 = vadd.f32 %v1365, %v1366
    %v1368 = vsel %vm850, %v1312, 0.0
    %v1369 = vadd.f32 %v1367, %v1368
    %v1370 = vsel %vm850, %v1317, 0.0
    %v1371 = vadd.f32 %v1369, %v1370
    %v1372 = vsel %vm850, %v1322, 0.0
    %v1373 = vadd.f32 %v1371, %v1372
    %v1374 = vsel %vm850, %v1327, 0.0
    %v1375 = vadd.f32 %v1373, %v1374
    %v1376 = vsel %vm850, %v1332, 0.0
    %v1377 = vadd.f32 %v1375, %v1376
    %v1378 = vsel %vm850, %v1337, 0.0
    %v1379 = vadd.f32 %v1377, %v1378
    %v1380 = vsel %vm850, %v1342, 0.0
    %v1381 = vadd.f32 %v1379, %v1380
    %v1382 = vsel %vm850, %v1347, 0.0
    %v1383 = vadd.f32 %v1381, %v1382
    %v1384 = vsel %vm850, %v1352, 0.0
    %v1385 = vadd.f32 %v1383, %v1384
    %v1386 = vrot.slane %v1385, 4
    %v1387 = vadd.f32 %v1385, %v1386
    %v1388 = vrot.slane %v1387, 2
    %v1389 = vadd.f32 %v1387, %v1388
    %v1390 = vrot.slane %v1389, 1
    %v1391 = vadd.f32 %v1389, %v1390
    %v1392 = vmul.f32 %v1391, 0.0078125
    %v1393 = vsub.f32 %v1277, %v1392
    %v1394 = vsub.f32 %v1282, %v1392
    %v1395 = vsub.f32 %v1287, %v1392
    %v1396 = vsub.f32 %v1292, %v1392
    %v1397 = vsub.f32 %v1297, %v1392
    %v1398 = vsub.f32 %v1302, %v1392
    %v1399 = vsub.f32 %v1307, %v1392
    %v1400 = vsub.f32 %v1312, %v1392
    %v1401 = vsub.f32 %v1317, %v1392
    %v1402 = vsub.f32 %v1322, %v1392
    %v1403 = vsub.f32 %v1327, %v1392
    %v1404 = vsub.f32 %v1332, %v1392
    %v1405 = vsub.f32 %v1337, %v1392
    %v1406 = vsub.f32 %v1342, %v1392
    %v1407 = vsub.f32 %v1347, %v1392
    %v1408 = vsub.f32 %v1352, %v1392
    %v1409 = vmul.f32 %v1393, %v1393
    %v1410 = vmul.f32 %v1394, %v1394
    %v1411 = vmul.f32 %v1395, %v1395
    %v1412 = vmul.f32 %v1396, %v1396
    %v1413 = vmul.f32 %v1397, %v1397
    %v1414 = vmul.f32 %v1398, %v1398
    %v1415 = vmul.f32 %v1399, %v1399
    %v1416 = vmul.f32 %v1400, %v1400
    %v1417 = vmul.f32 %v1401, %v1401
    %v1418 = vmul.f32 %v1402, %v1402
    %v1419 = vmul.f32 %v1403, %v1403
    %v1420 = vmul.f32 %v1404, %v1404
    %v1421 = vmul.f32 %v1405, %v1405
    %v1422 = vmul.f32 %v1406, %v1406
    %v1423 = vmul.f32 %v1407, %v1407
    %v1424 = vmul.f32 %v1408, %v1408
    %v1425 = vsel %vm850, %v1409, 0.0
    %v1426 = vsel %vm850, %v1410, 0.0
    %v1427 = vadd.f32 %v1425, %v1426
    %v1428 = vsel %vm850, %v1411, 0.0
    %v1429 = vadd.f32 %v1427, %v1428
    %v1430 = vsel %vm850, %v1412, 0.0
    %v1431 = vadd.f32 %v1429, %v1430
    %v1432 = vsel %vm850, %v1413, 0.0
    %v1433 = vadd.f32 %v1431, %v1432
    %v1434 = vsel %vm850, %v1414, 0.0
    %v1435 = vadd.f32 %v1433, %v1434
    %v1436 = vsel %vm850, %v1415, 0.0
    %v1437 = vadd.f32 %v1435, %v1436
    %v1438 = vsel %vm850, %v1416, 0.0
    %v1439 = vadd.f32 %v1437, %v1438
    %v1440 = vsel %vm850, %v1417, 0.0
    %v1441 = vadd.f32 %v1439, %v1440
    %v1442 = vsel %vm850, %v1418, 0.0
    %v1443 = vadd.f32 %v1441, %v1442
    %v1444 = vsel %vm850, %v1419, 0.0
    %v1445 = vadd.f32 %v1443, %v1444
    %v1446 = vsel %vm850, %v1420, 0.0
    %v1447 = vadd.f32 %v1445, %v1446
    %v1448 = vsel %vm850, %v1421, 0.0
    %v1449 = vadd.f32 %v1447, %v1448
    %v1450 = vsel %vm850, %v1422, 0.0
    %v1451 = vadd.f32 %v1449, %v1450
    %v1452 = vsel %vm850, %v1423, 0.0
    %v1453 = vadd.f32 %v1451, %v1452
    %v1454 = vsel %vm850, %v1424, 0.0
    %v1455 = vadd.f32 %v1453, %v1454
    %v1456 = vrot.slane %v1455, 4
    %v1457 = vadd.f32 %v1455, %v1456
    %v1458 = vrot.slane %v1457, 2
    %v1459 = vadd.f32 %v1457, %v1458
    %v1460 = vrot.slane %v1459, 1
    %v1461 = vadd.f32 %v1459, %v1460
    %v1462 = vmul.f32 %v1461, 0.0078125
    %v1463 = vld [vmem:[%s5] sm:$0x1]
    %v1464 = vld [vmem:[%s5 + $0x1] sm:$0x1]
    %v1465 = vadd.f32 %v1462, 1e-05
    %v1466 = vrsqrt.pop %v1465
    %v1467 = vmul.f32 %v1463, %v1466
    %v1468 = vlaneseq
    %v1469 = vshrl.u32 %v1468, 7
    %v1470 = vsub.s32 0, %v1469
    %v1471 = vrot.slane %v1467, %v1470
    %v1472 = vmul.f32 %v1393, %v1471
    %v1473 = vmul.f32 %v1394, %v1471
    %v1474 = vmul.f32 %v1395, %v1471
    %v1475 = vmul.f32 %v1396, %v1471
    %v1476 = vmul.f32 %v1397, %v1471
    %v1477 = vmul.f32 %v1398, %v1471
    %v1478 = vmul.f32 %v1399, %v1471
    %v1479 = vmul.f32 %v1400, %v1471
    %v1480 = vmul.f32 %v1401, %v1471
    %v1481 = vmul.f32 %v1402, %v1471
    %v1482 = vmul.f32 %v1403, %v1471
    %v1483 = vmul.f32 %v1404, %v1471
    %v1484 = vmul.f32 %v1405, %v1471
    %v1485 = vmul.f32 %v1406, %v1471
    %v1486 = vmul.f32 %v1407, %v1471
    %v1487 = vmul.f32 %v1408, %v1471
    %v1488 = vlaneseq
    %v1489 = vshrl.u32 %v1488, 7
    %v1490 = vsub.s32 0, %v1489
    %v1491 = vrot.slane %v1464, %v1490
    %v1492 = vadd.f32 %v1472, %v1491
    %v1493 = vadd.f32 %v1473, %v1491
    %v1494 = vadd.f32 %v1474, %v1491
    %v1495 = vadd.f32 %v1475, %v1491
    %v1496 = vadd.f32 %v1476, %v1491
    %v1497 = vadd.f32 %v1477, %v1491
    %v1498 = vadd.f32 %v1478, %v1491
    %v1499 = vadd.f32 %v1479, %v1491
    %v1500 = vadd.f32 %v1480, %v1491
    %v1501 = vadd.f32 %v1481, %v1491
    %v1502 = vadd.f32 %v1482, %v1491
    %v1503 = vadd.f32 %v1483, %v1491
    %v1504 = vadd.f32 %v1484, %v1491
    %v1505 = vadd.f32 %v1485, %v1491
    %v1506 = vadd.f32 %v1486, %v1491
    %v1507 = vadd.f32 %v1487, %v1491
    %v1508 = vmax.f32 %v1492, 0.0
    %v1509 = vmax.f32 %v1493, 0.0
    %v1510 = vmax.f32 %v1494, 0.0
    %v1511 = vmax.f32 %v1495, 0.0
    %v1512 = vmax.f32 %v1496, 0.0
    %v1513 = vmax.f32 %v1497, 0.0
    %v1514 = vmax.f32 %v1498, 0.0
    %v1515 = vmax.f32 %v1499, 0.0
    %v1516 = vmax.f32 %v1500, 0.0
    %v1517 = vmax.f32 %v1501, 0.0
    %v1518 = vmax.f32 %v1502, 0.0
    %v1519 = vmax.f32 %v1503, 0.0
    %v1520 = vmax.f32 %v1504, 0.0
    %v1521 = vmax.f32 %v1505, 0.0
    %v1522 = vmax.f32 %v1506, 0.0
    %v1523 = vmax.f32 %v1507, 0.0
    %v1524 = vsel %vm850, %v1508, 0.0
    %v1525 = vsel %vm850, %v1509, 0.0
    %v1526 = vadd.f32 %v1524, %v1525
    %v1527 = vsel %vm850, %v1510, 0.0
    %v1528 = vadd.f32 %v1526, %v1527
    %v1529 = vsel %vm850, %v1511, 0.0
    %v1530 = vadd.f32 %v1528, %v1529
    %v1531 = vsel %vm850, %v1512, 0.0
    %v1532 = vadd.f32 %v1530, %v1531
    %v1533 = vsel %vm850, %v1513, 0.0
    %v1534 = vadd.f32 %v1532, %v1533
    %v1535 = vsel %vm850, %v1514, 0.0
    %v1536 = vadd.f32 %v1534, %v1535
    %v1537 = vsel %vm850, %v1515, 0.0
    %v1538 = vadd.f32 %v1536, %v1537
    %v1539 = vrot.slane %v1538, 4
    %v1540 = vadd.f32 %v1538, %v1539
    %v1541 = vrot.slane %v1540, 2
    %v1542 = vadd.f32 %v1540, %v1541
    %v1543 = vrot.slane %v1542, 1
    %v1544 = vadd.f32 %v1542, %v1543
    %v1545 = vsel %vm850, %v1516, 0.0
    %v1546 = vsel %vm850, %v1517, 0.0
    %v1547 = vadd.f32 %v1545, %v1546
    %v1548 = vsel %vm850, %v1518, 0.0
    %v1549 = vadd.f32 %v1547, %v1548
    %v1550 = vsel %vm850, %v1519, 0.0
    %v1551 = vadd.f32 %v1549, %v1550
    %v1552 = vsel %vm850, %v1520, 0.0
    %v1553 = vadd.f32 %v1551, %v1552
    %v1554 = vsel %vm850, %v1521, 0.0
    %v1555 = vadd.f32 %v1553, %v1554
    %v1556 = vsel %vm850, %v1522, 0.0
    %v1557 = vadd.f32 %v1555, %v1556
    %v1558 = vsel %vm850, %v1523, 0.0
    %v1559 = vadd.f32 %v1557, %v1558
    %v1560 = vrot.slane %v1559, 4
    %v1561 = vadd.f32 %v1559, %v1560
    %v1562 = vrot.slane %v1561, 2
    %v1563 = vadd.f32 %v1561, %v1562
    %v1564 = vrot.slane %v1563, 1
    %v1565 = vadd.f32 %v1563, %v1564
    %v1566 = vrcp.pop 64.0
    %v1567 = vmul.f32 %v1544, %v1566
    %v1568 = vmul.f32 %v1565, %v1566
    %v1569 = vld [vmem:[%s5 + $0x2] sm:$0x1]
    %v1570 = vld [vmem:[%s5 + $0x3] sm:$0x1]
    %v1571 = vld [vmem:[#allocation2] sm:$0xff]
    %v1572 = vld [vmem:[#allocation2 + $0x8] sm:$0xff]
    %v1573 = vld [vmem:[#allocation2 + $0x10] sm:$0xff]
    %v1574 = vld [vmem:[#allocation2 + $0x18] sm:$0xff]
    %v1575 = vlaneseq
    %v1576 = vshrl.u32 %v1575, 7
    %v1577 = vsub.s32 0, %v1576
    %v1578 = vrot.slane %v1569, %v1577
    %vm1581 = vcmask 1041409
    %v1582 = vsel %vm1581, %v1568, %v1567
    %v1583 = vsel %vm850, %v1582, 0
    %1585 = vmatprep.subr.mxu0 0.0
    %1586 = vmatpush1.msra.mxu0 %v1571
    %1587 = vmatprep.subr.mxu0 0.0
    %1588 = vmatpush1.msra.mxu0 %v1572
    %1589 = vmatprep.subr.mxu0 0.0
    %1590 = vmatpush1.msra.mxu0 %v1573
    %1591 = vmatprep.subr.mxu0 0.0
    %1592 = vmatpush1.msra.mxu0 %v1574
    %1593 = vmatprep.subr.mxu0 0.0
    %1594 = vmatpush1.msra.mxu0 0.0
    %1595 = vmatprep.subr.mxu0 0.0
    %1596 = vmatpush1.msra.mxu0 0.0
    %1597 = vmatprep.subr.mxu0 0.0
    %1598 = vmatpush1.msra.mxu0 0.0
    %1599 = vmatprep.subr.mxu0 0.0
    %1600 = vmatpush1.msra.mxu0 0.0
    %1601 = vmatprep.subr.mxu0 0.0
    %1602 = vmatpush1.msra.mxu0 0.0
    %1603 = vmatprep.subr.mxu0 0.0
    %1604 = vmatpush1.msra.mxu0 0.0
    %1605 = vmatprep.subr.mxu0 0.0
    %1606 = vmatpush1.msra.mxu0 0.0
    %1607 = vmatprep.subr.mxu0 0.0
    %1608 = vmatpush1.msra.mxu0 0.0
    %1609 = vmatprep.subr.mxu0 0.0
    %1610 = vmatpush1.msra.mxu0 0.0
    %1611 = vmatprep.subr.mxu0 0.0
    %1612 = vmatpush1.msra.mxu0 0.0
    %1613 = vmatprep.subr.mxu0 0.0
    %1614 = vmatpush1.msra.mxu0 0.0
    %1615 = vmatprep.subr.mxu0 0.0
    %1616 = vmatpush1.msra.mxu0 0.0
    %1617 = vmatprep.subr.mxu0 0.0
    %1618 = vmatpush1.msra.mxu0 0.0
    %1619 = vmatprep.subr.mxu0 0.0
    %1620 = vmatpush1.msra.mxu0 0.0
    %1621 = vmatprep.subr.mxu0 0.0
    %1622 = vmatpush1.msra.mxu0 0.0
    %1623 = vmatprep.subr.mxu0 0.0
    %1624 = vmatpush1.msra.mxu0 0.0
    %1625 = vmatprep.subr.mxu0 0.0
    %1626 = vmatpush1.msra.mxu0 0.0
    %1627 = vmatprep.subr.mxu0 0.0
    %1628 = vmatpush1.msra.mxu0 0.0
    %1629 = vmatprep.subr.mxu0 0.0
    %1630 = vmatpush1.msra.mxu0 0.0
    %1631 = vmatprep.subr.mxu0 0.0
    %1632 = vmatpush1.msra.mxu0 0.0
    %1633 = vmatprep.subr.mxu0 0.0
    %1634 = vmatpush1.msra.mxu0 0.0
    %1635 = vmatprep.subr.mxu0 0.0
    %1636 = vmatpush1.msra.mxu0 0.0
    %1637 = vmatprep.subr.mxu0 0.0
    %1638 = vmatpush1.msra.mxu0 0.0
    %1639 = vmatprep.subr.mxu0 0.0
    %1640 = vmatpush1.msra.mxu0 0.0
    %1641 = vmatprep.subr.mxu0 0.0
    %1642 = vmatpush1.msra.mxu0 0.0
    %1643 = vmatprep.subr.mxu0 0.0
    %1644 = vmatpush1.msra.mxu0 0.0
    %1645 = vmatprep.subr.mxu0 0.0
    %1646 = vmatpush1.msra.mxu0 0.0
    %1647 = vmatprep.subr.mxu0 0.0
    %1648 = vmatpush1.msra.mxu0 0.0
    %1649 = vmatprep.mubr.f32.mxu0 0.0
    %1650 = vmatmul.mubr.f32.gmra.mrb[0].mxu0 %v1583
    %v1651 = vpop.f32.mrb[0].mxu0
    %v1652 = vadd.f32 %v1578, %v1651
    %v1653 = vpop.f32.mrb[0].mxu0
    %1654 = vdwg.mxu0
    %v1655 = vmax.f32 %v1652, 0.0
    %v1656 = vld [vmem:[%s4] sm:$0xff]
    %v1657 = vld [vmem:[%s4 + $0x8] sm:$0xff]
    %v1658 = vld [vmem:[%s4 + $0x10] sm:$0xff]
    %v1659 = vld [vmem:[%s4 + $0x18] sm:$0xff]
    %v1660 = vld [vmem:[%s4 + $0x20] sm:$0xff]
    %v1661 = vld [vmem:[%s4 + $0x28] sm:$0xff]
    %v1662 = vld [vmem:[%s4 + $0x30] sm:$0xff]
    %v1663 = vld [vmem:[%s4 + $0x38] sm:$0xff]
    %v1664 = vld [vmem:[%s4 + $0x40] sm:$0xff]
    %v1665 = vld [vmem:[%s4 + $0x48] sm:$0xff]
    %v1666 = vld [vmem:[%s4 + $0x50] sm:$0xff]
    %v1667 = vld [vmem:[%s4 + $0x58] sm:$0xff]
    %v1668 = vld [vmem:[%s4 + $0x60] sm:$0xff]
    %v1669 = vld [vmem:[%s4 + $0x68] sm:$0xff]
    %v1670 = vld [vmem:[%s4 + $0x70] sm:$0xff]
    %v1671 = vld [vmem:[%s4 + $0x78] sm:$0xff]
    %v1672 = vlaneseq
    %v1673 = vshrl.u32 %v1672, 7
    %v1674 = vsub.s32 0, %v1673
    %v1675 = vrot.slane %v1570, %v1674
    %1676 = vmatprep.subr.mxu0 0.0
    %1677 = vmatpush1.msra.mxu0 %v1656
    %1678 = vmatprep.subr.mxu0 0.0
    %1679 = vmatpush1.msra.mxu0 %v1657
    %1680 = vmatprep.subr.mxu0 0.0
    %1681 = vmatpush1.msra.mxu0 %v1658
    %1682 = vmatprep.subr.mxu0 0.0
    %1683 = vmatpush1.msra.mxu0 %v1659
    %1684 = vmatprep.subr.mxu0 0.0
    %1685 = vmatpush1.msra.mxu0 %v1660
    %1686 = vmatprep.subr.mxu0 0.0
    %1687 = vmatpush1.msra.mxu0 %v1661
    %1688 = vmatprep.subr.mxu0 0.0
    %1689 = vmatpush1.msra.mxu0 %v1662
    %1690 = vmatprep.subr.mxu0 0.0
    %1691 = vmatpush1.msra.mxu0 %v1663
    %1692 = vmatprep.subr.mxu0 0.0
    %1693 = vmatpush1.msra.mxu0 %v1664
    %1694 = vmatprep.subr.mxu0 0.0
    %1695 = vmatpush1.msra.mxu0 %v1665
    %1696 = vmatprep.subr.mxu0 0.0
    %1697 = vmatpush1.msra.mxu0 %v1666
    %1698 = vmatprep.subr.mxu0 0.0
    %1699 = vmatpush1.msra.mxu0 %v1667
    %1700 = vmatprep.subr.mxu0 0.0
    %1701 = vmatpush1.msra.mxu0 %v1668
    %1702 = vmatprep.subr.mxu0 0.0
    %1703 = vmatpush1.msra.mxu0 %v1669
    %1704 = vmatprep.subr.mxu0 0.0
    %1705 = vmatpush1.msra.mxu0 %v1670
    %1706 = vmatprep.subr.mxu0 0.0
    %1707 = vmatpush1.msra.mxu0 %v1671
    %1708 = vmatprep.subr.mxu0 0.0
    %1709 = vmatpush1.msra.mxu0 0.0
    %1710 = vmatprep.subr.mxu0 0.0
    %1711 = vmatpush1.msra.mxu0 0.0
    %1712 = vmatprep.subr.mxu0 0.0
    %1713 = vmatpush1.msra.mxu0 0.0
    %1714 = vmatprep.subr.mxu0 0.0
    %1715 = vmatpush1.msra.mxu0 0.0
    %1716 = vmatprep.subr.mxu0 0.0
    %1717 = vmatpush1.msra.mxu0 0.0
    %1718 = vmatprep.subr.mxu0 0.0
    %1719 = vmatpush1.msra.mxu0 0.0
    %1720 = vmatprep.subr.mxu0 0.0
    %1721 = vmatpush1.msra.mxu0 0.0
    %1722 = vmatprep.subr.mxu0 0.0
    %1723 = vmatpush1.msra.mxu0 0.0
    %1724 = vmatprep.subr.mxu0 0.0
    %1725 = vmatpush1.msra.mxu0 0.0
    %1726 = vmatprep.subr.mxu0 0.0
    %1727 = vmatpush1.msra.mxu0 0.0
    %1728 = vmatprep.subr.mxu0 0.0
    %1729 = vmatpush1.msra.mxu0 0.0
    %1730 = vmatprep.subr.mxu0 0.0
    %1731 = vmatpush1.msra.mxu0 0.0
    %1732 = vmatprep.subr.mxu0 0.0
    %1733 = vmatpush1.msra.mxu0 0.0
    %1734 = vmatprep.subr.mxu0 0.0
    %1735 = vmatpush1.msra.mxu0 0.0
    %1736 = vmatprep.subr.mxu0 0.0
    %1737 = vmatpush1.msra.mxu0 0.0
    %1738 = vmatprep.subr.mxu0 0.0
    %1739 = vmatpush1.msra.mxu0 0.0
    %1740 = vmatprep.mubr.f32.mxu0 0.0
    %1741 = vmatmul.mubr.f32.gmra.mrb[0].mxu0 %v1655
    %v1742 = vpop.f32.mrb[0].mxu0
    %v1743 = vadd.f32 %v1675, %v1742
    %v1744 = vpop.f32.mrb[0].mxu0
    %1745 = vdwg.mxu0
    %v1746 = vlaneseq
    %v1747 = vand.u32 %v1746, 127
    %vm1748 = vcmp.lt.s32.totalorder %v1747, 10
    %v1749 = vsel %vm1748, %v1743, -1e+30
    %vm1750 = vcmask 1041408
    %v1751 = vsel %vm1750, %v1749, -inf
    %1752 = vmax.xlane.f32.xlu0 %v1751
    %v1753 = vpop.xlane.xlu0 %1752
    %v1754 = vsub.f32 %v1743, %v1753
    %v1755 = vmul.f32 %v1754, 1.442695
    %v1756 = vpow.pop %v1755
    %v1757 = vsel %vm1748, %v1756, 0.0
    %v1758 = vsel %vm1750, %v1757, 0.0
    %1759 = vadd.xlane.f32.xlu0 %v1758
    %v1760 = vpop.xlane.xlu0 %1759
    %v1761 = vlog2.pop %v1760
    %v1762 = vmul.f32 %v1761, 0.6931472
    %v1763 = vadd.f32 %v1753, %v1762
    %v1764 = vld [vmem:[%s6] sm:$0x3]
    %1765 = vset.pattern.permute.xlu0 0
    %1766 = vperm.xlu0 %1765, %v1764
    %v1767 = vpop.permute.xlu0 %1766
    %vm1768 = vcmp.eq.s32.totalorder %v1747, %v1767
    %v1769 = vsel %vm1768, 1.0, 0.0
    %v1770 = vmul.f32 %v1743, %v1769
    %v1771 = vsel %vm1750, %v1770, 0.0
    %1772 = vadd.xlane.f32.xlu0 %v1771
    %v1773 = vpop.xlane.xlu0 %1772
    %v1774 = vsub.f32 %v1763, %v1773
    %v1775 = vsel %vm1750, %v1774, 0.0
    %v1776 = vrot.slane %v1775, 4
    %v1777 = vadd.f32 %v1775, %v1776
    %v1778 = vrot.slane %v1777, 2
    %v1779 = vadd.f32 %v1777, %v1778
    %v1780 = vrot.slane %v1779, 1
    %v1781 = vadd.f32 %v1779, %v1780
    %v1782 = vmul.f32 %v1781, 0.5
    %1783 = vst [vmem:[%s7] sm:$0x3] %v1743
    %1784 = vst [vmem:[%s7 + $0x2] sm:$0x1] %v1782
    // Predicated region
    $region34: #{aux_network_forward.1} parent=1 // pred_check
      _
    $region35: #{aux_network_forward.1} parent=1 // pred_check_branch
      %1786 = sbr.rel (0) target = $region37
    $region36: #{aux_network_forward.1} parent=1 // pred_region
      _
    $region37: #{aux_network_forward.1} parent=1 // pred_fallthru
      _
    // Predicated region
    $region38: #{aux_network_forward.1} parent=1 // pred_check
      _
    $region39: #{aux_network_forward.1} parent=1 // pred_check_branch
      %1788 = sbr.rel (0) target = $region41
    $region40: #{aux_network_forward.1} parent=1 // pred_region
      _
    $region41: #{aux_network_forward.1} parent=1 // pred_fallthru
      _
    %1789 = vsyncpa [#allocation3], 1

</llo_original>
